<compile_context>
chip_gen: v7x
topology: tpu7x:2x2x1
jax: 0.10.0
libtpu: 0.0.40
codegen_flags: <defaults>
</compile_context>

<pallas_src>
import jax
import jax.numpy as jnp
from jax import lax
from jax.experimental import pallas as pl
from jax.experimental.pallas import tpu as pltpu


def lstm_encoder_kernel(ids_ref, slab_ref, out_ref):
    """Fused pre-projected-embedding gather + LSTM recurrence + batch mean.

    ids_ref:  (T*B,)       int32, SMEM  -- seq-major flattened token ids
    slab_ref: (Vpad+H, 4H) f32,   VMEM  -- rows [0, Vpad): proj_table[v] =
              E[v] @ W_ih^T + (b_ih + b_hh);  rows [Vpad, Vpad+H): W_hh^T
    out_ref:  (1, T*H)     f32,   VMEM  -- row t of the (T, H) result lives
              in lanes [t*H, (t+1)*H)
    """
    G = slab_ref.shape[1]                 # 4H
    H = G // 4
    Vpad = slab_ref.shape[0] - H          # multiple of 8 by construction
    TB = ids_ref.shape[0]
    T = out_ref.shape[1] // H
    B = TB // T

    # Recurrent weight, loaded once (aligned static sublane slice).
    whh = slab_ref[Vpad:Vpad + H, :]                                  # (H, 4H)

    # Fused gather: x_t[b] = proj_table[ids[t, b]].  Scalar-indexed dynamic
    # row reads driven from SMEM; independent of h/c, so fully hoisted off
    # the serial recurrence path.
    x_steps = []
    for t in range(T):
        rows = [slab_ref[pl.ds(ids_ref[t * B + b], 1), :] for b in range(B)]
        x_steps.append(jnp.concatenate(rows, axis=0))                 # (B, 4H)

    # Lane mask selecting the "g" gate lanes (tanh); PyTorch order is i,f,g,o.
    lane = lax.broadcasted_iota(jnp.int32, (B, G), 1)
    g_lanes = (lane >= 2 * H) & (lane < 3 * H)

    h = jnp.zeros((B, H), jnp.float32)
    c = jnp.zeros((B, H), jnp.float32)
    inv_b = jnp.float32(1.0 / B)
    half = jnp.float32(0.5)

    for t in range(T):  # statically unrolled; h/c carried in vregs
        gates = x_steps[t] + jnp.dot(h, whh,
                                     preferred_element_type=jnp.float32)
        # Single EUP pass for all four gates:
        #   sigmoid(x) = 0.5 * (1 + tanh(x / 2));  g-lanes take plain tanh.
        pre = jnp.where(g_lanes, gates, half * gates)
        th = jnp.tanh(pre)
        act = jnp.where(g_lanes, th, half * th + half)
        i = act[:, 0:H]
        f = act[:, H:2 * H]
        g = act[:, 2 * H:3 * H]
        o = act[:, 3 * H:4 * H]
        c = f * c + i * g
        h = o * jnp.tanh(c)
        # h.mean(dim=1) in the module == mean over the batch axis
        # (nn.LSTM default is seq-first: h is (T, B, H)).
        out_ref[:, t * H:(t + 1) * H] = (
            jnp.sum(h, axis=0, keepdims=True) * inv_b)


def prepare_lstm_encoder_params(embed_table, w_ih, w_hh, b_ih, b_hh):
    """Call-invariant weight prep -- run once, reuse across forward calls.

    Returns a single f32 slab:
      rows [0, Vpad)      : proj_table = embed_table @ W_ih^T + (b_ih + b_hh)
      rows [Vpad, Vpad+H) : W_hh^T
    """
    H = w_hh.shape[1]
    et = embed_table.astype(jnp.float32)
    proj = (jnp.dot(et, w_ih.T.astype(jnp.float32),
                    precision=lax.Precision.HIGHEST)
            + (b_ih + b_hh).astype(jnp.float32)[None, :])             # (V, 4H)
    V = proj.shape[0]
    Vpad = ((V + 7) // 8) * 8
    proj = jnp.pad(proj, ((0, Vpad - V), (0, 0)))
    slab = jnp.concatenate([proj, w_hh.T.astype(jnp.float32)], axis=0)
    return slab                                                       # (Vpad+H, 4H)


@jax.jit
def lstm_encoder_fwd(x, slab):
    """Per-call hot path: one fused Pallas kernel + a free reshape.

    x: (T, B) int32 token ids (seq-first, matching nn.LSTM's default layout).
    Returns (T, H): per-step hidden state averaged over the batch axis.
    """
    T, B = x.shape
    H = slab.shape[1] // 4
    ids = x.reshape(T * B).astype(jnp.int32)

    out_flat = pl.pallas_call(
        lstm_encoder_kernel,
        out_shape=jax.ShapeDtypeStruct((1, T * H), jnp.float32),
        in_specs=[pl.BlockSpec(memory_space=pltpu.MemorySpace.SMEM),   # ids
                  pl.BlockSpec(memory_space=pltpu.MemorySpace.VMEM)],  # slab
        out_specs=pl.BlockSpec(memory_space=pltpu.MemorySpace.VMEM),
    )(ids, slab)
    return out_flat.reshape(T, H)


def lstm_encoder_reference(x, embed_table, w_ih, w_hh, b_ih, b_hh):
    """Pure-JAX reference matching PyTorch nn.LSTM semantics."""
    T, B = x.shape
    H = w_hh.shape[1]
    embeds = embed_table[x].astype(jnp.float32)
    h = jnp.zeros((B, H), jnp.float32)
    c = jnp.zeros((B, H), jnp.float32)
    outs = []
    for t in range(T):
        gates = embeds[t] @ w_ih.T + h @ w_hh.T + b_ih + b_hh
        i = jax.nn.sigmoid(gates[:, 0:H])
        f = jax.nn.sigmoid(gates[:, H:2 * H])
        g = jnp.tanh(gates[:, 2 * H:3 * H])
        o = jax.nn.sigmoid(gates[:, 3 * H:4 * H])
        c = f * c + i * g
        h = o * jnp.tanh(c)
        outs.append(h.mean(axis=0))
    return jnp.stack(outs)


if __name__ == "__main__":
    # Small deterministic config consistent with the module.
    vocab_size = 50
    embed_dim = 16     # E
    hidden_dim = 32    # H  (4H = 128 lanes, T*H = 256 lanes)
    T, B = 8, 2        # seq length, batch

    key = jax.random.PRNGKey(0)
    k_emb, k_wih, k_whh, k_bih, k_bhh, k_x = jax.random.split(key, 6)

    # nn.Embedding(vocab_size+1, E) then nn.init.normal_(std=0.01)
    # (normal_ overwrites the padding row too, so no zero row).
    embed_table = 0.01 * jax.random.normal(k_emb, (vocab_size + 1, embed_dim),
                                           dtype=jnp.float32)

    # nn.LSTM(E, H) params: uniform(-1/sqrt(H), 1/sqrt(H)), gate order i,f,g,o.
    bound = 1.0 / (hidden_dim ** 0.5)
    w_ih = jax.random.uniform(k_wih, (4 * hidden_dim, embed_dim),
                              minval=-bound, maxval=bound, dtype=jnp.float32)
    w_hh = jax.random.uniform(k_whh, (4 * hidden_dim, hidden_dim),
                              minval=-bound, maxval=bound, dtype=jnp.float32)
    b_ih = jax.random.uniform(k_bih, (4 * hidden_dim,),
                              minval=-bound, maxval=bound, dtype=jnp.float32)
    b_hh = jax.random.uniform(k_bhh, (4 * hidden_dim,),
                              minval=-bound, maxval=bound, dtype=jnp.float32)

    # Token ids in [0, vocab_size] (embedding table has vocab_size+1 rows).
    x = jax.random.randint(k_x, (T, B), minval=0, maxval=vocab_size + 1,
                           dtype=jnp.int32)

    # Call-invariant prep (once), then the per-call hot path.
    slab = prepare_lstm_encoder_params(embed_table, w_ih, w_hh, b_ih, b_hh)
    out = lstm_encoder_fwd(x, slab)
    out = jax.block_until_ready(out)

    ref = lstm_encoder_reference(x, embed_table, w_ih, w_hh, b_ih, b_hh)
    assert out.shape == (T, hidden_dim)
    assert jnp.allclose(out, ref, atol=1e-5, rtol=1e-5), "mismatch vs reference"

    # TODO(synk): self.fc_layers is defined in __init__ but never used in
    # forward(), so it is intentionally not implemented here.
    print("KERNEL_OK")
</pallas_src>

<mosaic_0001>
module attributes {stable_mosaic.version = 11 : i64} {
  func.func @lstm_encoder_kernel(%arg0: memref<16xi32, #tpu.memory_space<smem>>, %arg1: memref<88x128xf32, #tpu.memory_space<vmem>>, %arg2: memref<1x256xf32, #tpu.memory_space<vmem>>) attributes {dimension_semantics = [], scalar_prefetch = 0 : i64, scratch_operands = 0 : i64, tpu.core_type = #tpu.core_type<tc>} {
    %c56 = arith.constant 56 : index
    %c0 = arith.constant 0 : index
    %0 = vector.load %arg1[%c56, %c0] : memref<88x128xf32, #tpu.memory_space<vmem>>, vector<32x128xf32>
    %c0_0 = arith.constant 0 : index
    %1 = memref.load %arg0[%c0_0] : memref<16xi32, #tpu.memory_space<smem>>
    %2 = arith.index_cast %1 : i32 to index
    %c0_1 = arith.constant 0 : index
    %3 = vector.load %arg1[%2, %c0_1] : memref<88x128xf32, #tpu.memory_space<vmem>>, vector<1x128xf32>
    %c1 = arith.constant 1 : index
    %4 = memref.load %arg0[%c1] : memref<16xi32, #tpu.memory_space<smem>>
    %5 = arith.index_cast %4 : i32 to index
    %c0_2 = arith.constant 0 : index
    %6 = vector.load %arg1[%5, %c0_2] : memref<88x128xf32, #tpu.memory_space<vmem>>, vector<1x128xf32>
    %7 = tpu.concatenate %3, %6 in 0 : vector<1x128xf32>, vector<1x128xf32> -> vector<2x128xf32>
    %c2 = arith.constant 2 : index
    %8 = memref.load %arg0[%c2] : memref<16xi32, #tpu.memory_space<smem>>
    %9 = arith.index_cast %8 : i32 to index
    %c0_3 = arith.constant 0 : index
    %10 = vector.load %arg1[%9, %c0_3] : memref<88x128xf32, #tpu.memory_space<vmem>>, vector<1x128xf32>
    %c3 = arith.constant 3 : index
    %11 = memref.load %arg0[%c3] : memref<16xi32, #tpu.memory_space<smem>>
    %12 = arith.index_cast %11 : i32 to index
    %c0_4 = arith.constant 0 : index
    %13 = vector.load %arg1[%12, %c0_4] : memref<88x128xf32, #tpu.memory_space<vmem>>, vector<1x128xf32>
    %14 = tpu.concatenate %10, %13 in 0 : vector<1x128xf32>, vector<1x128xf32> -> vector<2x128xf32>
    %c4 = arith.constant 4 : index
    %15 = memref.load %arg0[%c4] : memref<16xi32, #tpu.memory_space<smem>>
    %16 = arith.index_cast %15 : i32 to index
    %c0_5 = arith.constant 0 : index
    %17 = vector.load %arg1[%16, %c0_5] : memref<88x128xf32, #tpu.memory_space<vmem>>, vector<1x128xf32>
    %c5 = arith.constant 5 : index
    %18 = memref.load %arg0[%c5] : memref<16xi32, #tpu.memory_space<smem>>
    %19 = arith.index_cast %18 : i32 to index
    %c0_6 = arith.constant 0 : index
    %20 = vector.load %arg1[%19, %c0_6] : memref<88x128xf32, #tpu.memory_space<vmem>>, vector<1x128xf32>
    %21 = tpu.concatenate %17, %20 in 0 : vector<1x128xf32>, vector<1x128xf32> -> vector<2x128xf32>
    %c6 = arith.constant 6 : index
    %22 = memref.load %arg0[%c6] : memref<16xi32, #tpu.memory_space<smem>>
    %23 = arith.index_cast %22 : i32 to index
    %c0_7 = arith.constant 0 : index
    %24 = vector.load %arg1[%23, %c0_7] : memref<88x128xf32, #tpu.memory_space<vmem>>, vector<1x128xf32>
    %c7 = arith.constant 7 : index
    %25 = memref.load %arg0[%c7] : memref<16xi32, #tpu.memory_space<smem>>
    %26 = arith.index_cast %25 : i32 to index
    %c0_8 = arith.constant 0 : index
    %27 = vector.load %arg1[%26, %c0_8] : memref<88x128xf32, #tpu.memory_space<vmem>>, vector<1x128xf32>
    %28 = tpu.concatenate %24, %27 in 0 : vector<1x128xf32>, vector<1x128xf32> -> vector<2x128xf32>
    %c8 = arith.constant 8 : index
    %29 = memref.load %arg0[%c8] : memref<16xi32, #tpu.memory_space<smem>>
    %30 = arith.index_cast %29 : i32 to index
    %c0_9 = arith.constant 0 : index
    %31 = vector.load %arg1[%30, %c0_9] : memref<88x128xf32, #tpu.memory_space<vmem>>, vector<1x128xf32>
    %c9 = arith.constant 9 : index
    %32 = memref.load %arg0[%c9] : memref<16xi32, #tpu.memory_space<smem>>
    %33 = arith.index_cast %32 : i32 to index
    %c0_10 = arith.constant 0 : index
    %34 = vector.load %arg1[%33, %c0_10] : memref<88x128xf32, #tpu.memory_space<vmem>>, vector<1x128xf32>
    %35 = tpu.concatenate %31, %34 in 0 : vector<1x128xf32>, vector<1x128xf32> -> vector<2x128xf32>
    %c10 = arith.constant 10 : index
    %36 = memref.load %arg0[%c10] : memref<16xi32, #tpu.memory_space<smem>>
    %37 = arith.index_cast %36 : i32 to index
    %c0_11 = arith.constant 0 : index
    %38 = vector.load %arg1[%37, %c0_11] : memref<88x128xf32, #tpu.memory_space<vmem>>, vector<1x128xf32>
    %c11 = arith.constant 11 : index
    %39 = memref.load %arg0[%c11] : memref<16xi32, #tpu.memory_space<smem>>
    %40 = arith.index_cast %39 : i32 to index
    %c0_12 = arith.constant 0 : index
    %41 = vector.load %arg1[%40, %c0_12] : memref<88x128xf32, #tpu.memory_space<vmem>>, vector<1x128xf32>
    %42 = tpu.concatenate %38, %41 in 0 : vector<1x128xf32>, vector<1x128xf32> -> vector<2x128xf32>
    %c12 = arith.constant 12 : index
    %43 = memref.load %arg0[%c12] : memref<16xi32, #tpu.memory_space<smem>>
    %44 = arith.index_cast %43 : i32 to index
    %c0_13 = arith.constant 0 : index
    %45 = vector.load %arg1[%44, %c0_13] : memref<88x128xf32, #tpu.memory_space<vmem>>, vector<1x128xf32>
    %c13 = arith.constant 13 : index
    %46 = memref.load %arg0[%c13] : memref<16xi32, #tpu.memory_space<smem>>
    %47 = arith.index_cast %46 : i32 to index
    %c0_14 = arith.constant 0 : index
    %48 = vector.load %arg1[%47, %c0_14] : memref<88x128xf32, #tpu.memory_space<vmem>>, vector<1x128xf32>
    %49 = tpu.concatenate %45, %48 in 0 : vector<1x128xf32>, vector<1x128xf32> -> vector<2x128xf32>
    %c14 = arith.constant 14 : index
    %50 = memref.load %arg0[%c14] : memref<16xi32, #tpu.memory_space<smem>>
    %51 = arith.index_cast %50 : i32 to index
    %c0_15 = arith.constant 0 : index
    %52 = vector.load %arg1[%51, %c0_15] : memref<88x128xf32, #tpu.memory_space<vmem>>, vector<1x128xf32>
    %c15 = arith.constant 15 : index
    %53 = memref.load %arg0[%c15] : memref<16xi32, #tpu.memory_space<smem>>
    %54 = arith.index_cast %53 : i32 to index
    %c0_16 = arith.constant 0 : index
    %55 = vector.load %arg1[%54, %c0_16] : memref<88x128xf32, #tpu.memory_space<vmem>>, vector<1x128xf32>
    %56 = tpu.concatenate %52, %55 in 0 : vector<1x128xf32>, vector<1x128xf32> -> vector<2x128xf32>
    %57 = tpu.iota {dimensions = array<i32: 1>} : vector<2x128xi32>
    %c64_i32 = arith.constant 64 : i32
    %58 = vector.broadcast %c64_i32 : i32 to vector<2x128xi32>
    %59 = arith.cmpi sge, %57, %58 : vector<2x128xi32>
    %c96_i32 = arith.constant 96 : i32
    %60 = vector.broadcast %c96_i32 : i32 to vector<2x128xi32>
    %61 = arith.cmpi slt, %57, %60 : vector<2x128xi32>
    %62 = arith.andi %59, %61 : vector<2x128xi1>
    %cst = arith.constant 0.000000e+00 : f32
    %63 = vector.broadcast %cst : f32 to vector<2x32xf32>
    %cst_17 = arith.constant 0.000000e+00 : f32
    %64 = vector.broadcast %cst_17 : f32 to vector<2x32xf32>
    %cst_18 = arith.constant dense<0.000000e+00> : vector<2x128xf32>
    %65 = tpu.matmul %63, %0, %cst_18 {dimension_numbers = #tpu.dot_dimension_numbers<[1], [0], [0], [1], [0, 0, 1, 1], [], []>} : vector<2x32xf32>, vector<32x128xf32>, vector<2x128xf32> -> vector<2x128xf32>
    %66 = arith.addf %7, %65 : vector<2x128xf32>
    %cst_19 = arith.constant 5.000000e-01 : f32
    %67 = vector.broadcast %cst_19 : f32 to vector<2x128xf32>
    %68 = arith.mulf %67, %66 : vector<2x128xf32>
    %69 = arith.select %62, %66, %68 : vector<2x128xi1>, vector<2x128xf32>
    %70 = math.tanh %69 : vector<2x128xf32>
    %cst_20 = arith.constant 5.000000e-01 : f32
    %71 = vector.broadcast %cst_20 : f32 to vector<2x128xf32>
    %72 = arith.mulf %71, %70 : vector<2x128xf32>
    %cst_21 = arith.constant 5.000000e-01 : f32
    %73 = vector.broadcast %cst_21 : f32 to vector<2x128xf32>
    %74 = arith.addf %72, %73 : vector<2x128xf32>
    %75 = arith.select %62, %70, %74 : vector<2x128xi1>, vector<2x128xf32>
    %76 = vector.extract_strided_slice %75 {offsets = [0, 0], sizes = [2, 32], strides = [1, 1]} : vector<2x128xf32> to vector<2x32xf32>
    %77 = vector.extract_strided_slice %75 {offsets = [0, 32], sizes = [2, 32], strides = [1, 1]} : vector<2x128xf32> to vector<2x32xf32>
    %78 = vector.extract_strided_slice %75 {offsets = [0, 64], sizes = [2, 32], strides = [1, 1]} : vector<2x128xf32> to vector<2x32xf32>
    %79 = vector.extract_strided_slice %75 {offsets = [0, 96], sizes = [2, 32], strides = [1, 1]} : vector<2x128xf32> to vector<2x32xf32>
    %80 = arith.mulf %77, %64 : vector<2x32xf32>
    %81 = arith.mulf %76, %78 : vector<2x32xf32>
    %82 = arith.addf %80, %81 : vector<2x32xf32>
    %83 = math.tanh %82 : vector<2x32xf32>
    %84 = arith.mulf %79, %83 : vector<2x32xf32>
    %cst_22 = arith.constant dense<0.000000e+00> : vector<32xf32>
    %85 = vector.multi_reduction <add>, %84, %cst_22 [0] : vector<2x32xf32> to vector<32xf32>
    %86 = vector.shape_cast %85 : vector<32xf32> to vector<1x32xf32>
    %cst_23 = arith.constant 5.000000e-01 : f32
    %87 = vector.broadcast %cst_23 : f32 to vector<1x32xf32>
    %88 = arith.mulf %86, %87 : vector<1x32xf32>
    %c0_24 = arith.constant 0 : index
    %c0_25 = arith.constant 0 : index
    %89 = vector.load %arg2[%c0_24, %c0_25] : memref<1x256xf32, #tpu.memory_space<vmem>>, vector<1x32xf32>
    tpu.vector_store %arg2[%c0_24, %c0_25], %88 {strides = array<i32>} : memref<1x256xf32, #tpu.memory_space<vmem>>, vector<1x32xf32>,
    %cst_26 = arith.constant dense<0.000000e+00> : vector<2x128xf32>
    %90 = tpu.matmul %84, %0, %cst_26 {dimension_numbers = #tpu.dot_dimension_numbers<[1], [0], [0], [1], [0, 0, 1, 1], [], []>} : vector<2x32xf32>, vector<32x128xf32>, vector<2x128xf32> -> vector<2x128xf32>
    %91 = arith.addf %14, %90 : vector<2x128xf32>
    %cst_27 = arith.constant 5.000000e-01 : f32
    %92 = vector.broadcast %cst_27 : f32 to vector<2x128xf32>
    %93 = arith.mulf %92, %91 : vector<2x128xf32>
    %94 = arith.select %62, %91, %93 : vector<2x128xi1>, vector<2x128xf32>
    %95 = math.tanh %94 : vector<2x128xf32>
    %cst_28 = arith.constant 5.000000e-01 : f32
    %96 = vector.broadcast %cst_28 : f32 to vector<2x128xf32>
    %97 = arith.mulf %96, %95 : vector<2x128xf32>
    %cst_29 = arith.constant 5.000000e-01 : f32
    %98 = vector.broadcast %cst_29 : f32 to vector<2x128xf32>
    %99 = arith.addf %97, %98 : vector<2x128xf32>
    %100 = arith.select %62, %95, %99 : vector<2x128xi1>, vector<2x128xf32>
    %101 = vector.extract_strided_slice %100 {offsets = [0, 0], sizes = [2, 32], strides = [1, 1]} : vector<2x128xf32> to vector<2x32xf32>
    %102 = vector.extract_strided_slice %100 {offsets = [0, 32], sizes = [2, 32], strides = [1, 1]} : vector<2x128xf32> to vector<2x32xf32>
    %103 = vector.extract_strided_slice %100 {offsets = [0, 64], sizes = [2, 32], strides = [1, 1]} : vector<2x128xf32> to vector<2x32xf32>
    %104 = vector.extract_strided_slice %100 {offsets = [0, 96], sizes = [2, 32], strides = [1, 1]} : vector<2x128xf32> to vector<2x32xf32>
    %105 = arith.mulf %102, %82 : vector<2x32xf32>
    %106 = arith.mulf %101, %103 : vector<2x32xf32>
    %107 = arith.addf %105, %106 : vector<2x32xf32>
    %108 = math.tanh %107 : vector<2x32xf32>
    %109 = arith.mulf %104, %108 : vector<2x32xf32>
    %cst_30 = arith.constant dense<0.000000e+00> : vector<32xf32>
    %110 = vector.multi_reduction <add>, %109, %cst_30 [0] : vector<2x32xf32> to vector<32xf32>
    %111 = vector.shape_cast %110 : vector<32xf32> to vector<1x32xf32>
    %cst_31 = arith.constant 5.000000e-01 : f32
    %112 = vector.broadcast %cst_31 : f32 to vector<1x32xf32>
    %113 = arith.mulf %111, %112 : vector<1x32xf32>
    %c0_32 = arith.constant 0 : index
    %c32 = arith.constant 32 : index
    %114 = vector.load %arg2[%c0_32, %c32] : memref<1x256xf32, #tpu.memory_space<vmem>>, vector<1x32xf32>
    tpu.vector_store %arg2[%c0_32, %c32], %113 {strides = array<i32>} : memref<1x256xf32, #tpu.memory_space<vmem>>, vector<1x32xf32>,
    %cst_33 = arith.constant dense<0.000000e+00> : vector<2x128xf32>
    %115 = tpu.matmul %109, %0, %cst_33 {dimension_numbers = #tpu.dot_dimension_numbers<[1], [0], [0], [1], [0, 0, 1, 1], [], []>} : vector<2x32xf32>, vector<32x128xf32>, vector<2x128xf32> -> vector<2x128xf32>
    %116 = arith.addf %21, %115 : vector<2x128xf32>
    %cst_34 = arith.constant 5.000000e-01 : f32
    %117 = vector.broadcast %cst_34 : f32 to vector<2x128xf32>
    %118 = arith.mulf %117, %116 : vector<2x128xf32>
    %119 = arith.select %62, %116, %118 : vector<2x128xi1>, vector<2x128xf32>
    %120 = math.tanh %119 : vector<2x128xf32>
    %cst_35 = arith.constant 5.000000e-01 : f32
    %121 = vector.broadcast %cst_35 : f32 to vector<2x128xf32>
    %122 = arith.mulf %121, %120 : vector<2x128xf32>
    %cst_36 = arith.constant 5.000000e-01 : f32
    %123 = vector.broadcast %cst_36 : f32 to vector<2x128xf32>
    %124 = arith.addf %122, %123 : vector<2x128xf32>
    %125 = arith.select %62, %120, %124 : vector<2x128xi1>, vector<2x128xf32>
    %126 = vector.extract_strided_slice %125 {offsets = [0, 0], sizes = [2, 32], strides = [1, 1]} : vector<2x128xf32> to vector<2x32xf32>
    %127 = vector.extract_strided_slice %125 {offsets = [0, 32], sizes = [2, 32], strides = [1, 1]} : vector<2x128xf32> to vector<2x32xf32>
    %128 = vector.extract_strided_slice %125 {offsets = [0, 64], sizes = [2, 32], strides = [1, 1]} : vector<2x128xf32> to vector<2x32xf32>
    %129 = vector.extract_strided_slice %125 {offsets = [0, 96], sizes = [2, 32], strides = [1, 1]} : vector<2x128xf32> to vector<2x32xf32>
    %130 = arith.mulf %127, %107 : vector<2x32xf32>
    %131 = arith.mulf %126, %128 : vector<2x32xf32>
    %132 = arith.addf %130, %131 : vector<2x32xf32>
    %133 = math.tanh %132 : vector<2x32xf32>
    %134 = arith.mulf %129, %133 : vector<2x32xf32>
    %cst_37 = arith.constant dense<0.000000e+00> : vector<32xf32>
    %135 = vector.multi_reduction <add>, %134, %cst_37 [0] : vector<2x32xf32> to vector<32xf32>
    %136 = vector.shape_cast %135 : vector<32xf32> to vector<1x32xf32>
    %cst_38 = arith.constant 5.000000e-01 : f32
    %137 = vector.broadcast %cst_38 : f32 to vector<1x32xf32>
    %138 = arith.mulf %136, %137 : vector<1x32xf32>
    %c0_39 = arith.constant 0 : index
    %c64 = arith.constant 64 : index
    %139 = vector.load %arg2[%c0_39, %c64] : memref<1x256xf32, #tpu.memory_space<vmem>>, vector<1x32xf32>
    tpu.vector_store %arg2[%c0_39, %c64], %138 {strides = array<i32>} : memref<1x256xf32, #tpu.memory_space<vmem>>, vector<1x32xf32>,
    %cst_40 = arith.constant dense<0.000000e+00> : vector<2x128xf32>
    %140 = tpu.matmul %134, %0, %cst_40 {dimension_numbers = #tpu.dot_dimension_numbers<[1], [0], [0], [1], [0, 0, 1, 1], [], []>} : vector<2x32xf32>, vector<32x128xf32>, vector<2x128xf32> -> vector<2x128xf32>
    %141 = arith.addf %28, %140 : vector<2x128xf32>
    %cst_41 = arith.constant 5.000000e-01 : f32
    %142 = vector.broadcast %cst_41 : f32 to vector<2x128xf32>
    %143 = arith.mulf %142, %141 : vector<2x128xf32>
    %144 = arith.select %62, %141, %143 : vector<2x128xi1>, vector<2x128xf32>
    %145 = math.tanh %144 : vector<2x128xf32>
    %cst_42 = arith.constant 5.000000e-01 : f32
    %146 = vector.broadcast %cst_42 : f32 to vector<2x128xf32>
    %147 = arith.mulf %146, %145 : vector<2x128xf32>
    %cst_43 = arith.constant 5.000000e-01 : f32
    %148 = vector.broadcast %cst_43 : f32 to vector<2x128xf32>
    %149 = arith.addf %147, %148 : vector<2x128xf32>
    %150 = arith.select %62, %145, %149 : vector<2x128xi1>, vector<2x128xf32>
    %151 = vector.extract_strided_slice %150 {offsets = [0, 0], sizes = [2, 32], strides = [1, 1]} : vector<2x128xf32> to vector<2x32xf32>
    %152 = vector.extract_strided_slice %150 {offsets = [0, 32], sizes = [2, 32], strides = [1, 1]} : vector<2x128xf32> to vector<2x32xf32>
    %153 = vector.extract_strided_slice %150 {offsets = [0, 64], sizes = [2, 32], strides = [1, 1]} : vector<2x128xf32> to vector<2x32xf32>
    %154 = vector.extract_strided_slice %150 {offsets = [0, 96], sizes = [2, 32], strides = [1, 1]} : vector<2x128xf32> to vector<2x32xf32>
    %155 = arith.mulf %152, %132 : vector<2x32xf32>
    %156 = arith.mulf %151, %153 : vector<2x32xf32>
    %157 = arith.addf %155, %156 : vector<2x32xf32>
    %158 = math.tanh %157 : vector<2x32xf32>
    %159 = arith.mulf %154, %158 : vector<2x32xf32>
    %cst_44 = arith.constant dense<0.000000e+00> : vector<32xf32>
    %160 = vector.multi_reduction <add>, %159, %cst_44 [0] : vector<2x32xf32> to vector<32xf32>
    %161 = vector.shape_cast %160 : vector<32xf32> to vector<1x32xf32>
    %cst_45 = arith.constant 5.000000e-01 : f32
    %162 = vector.broadcast %cst_45 : f32 to vector<1x32xf32>
    %163 = arith.mulf %161, %162 : vector<1x32xf32>
    %c0_46 = arith.constant 0 : index
    %c96 = arith.constant 96 : index
    %164 = vector.load %arg2[%c0_46, %c96] : memref<1x256xf32, #tpu.memory_space<vmem>>, vector<1x32xf32>
    tpu.vector_store %arg2[%c0_46, %c96], %163 {strides = array<i32>} : memref<1x256xf32, #tpu.memory_space<vmem>>, vector<1x32xf32>,
    %cst_47 = arith.constant dense<0.000000e+00> : vector<2x128xf32>
    %165 = tpu.matmul %159, %0, %cst_47 {dimension_numbers = #tpu.dot_dimension_numbers<[1], [0], [0], [1], [0, 0, 1, 1], [], []>} : vector<2x32xf32>, vector<32x128xf32>, vector<2x128xf32> -> vector<2x128xf32>
    %166 = arith.addf %35, %165 : vector<2x128xf32>
    %cst_48 = arith.constant 5.000000e-01 : f32
    %167 = vector.broadcast %cst_48 : f32 to vector<2x128xf32>
    %168 = arith.mulf %167, %166 : vector<2x128xf32>
    %169 = arith.select %62, %166, %168 : vector<2x128xi1>, vector<2x128xf32>
    %170 = math.tanh %169 : vector<2x128xf32>
    %cst_49 = arith.constant 5.000000e-01 : f32
    %171 = vector.broadcast %cst_49 : f32 to vector<2x128xf32>
    %172 = arith.mulf %171, %170 : vector<2x128xf32>
    %cst_50 = arith.constant 5.000000e-01 : f32
    %173 = vector.broadcast %cst_50 : f32 to vector<2x128xf32>
    %174 = arith.addf %172, %173 : vector<2x128xf32>
    %175 = arith.select %62, %170, %174 : vector<2x128xi1>, vector<2x128xf32>
    %176 = vector.extract_strided_slice %175 {offsets = [0, 0], sizes = [2, 32], strides = [1, 1]} : vector<2x128xf32> to vector<2x32xf32>
    %177 = vector.extract_strided_slice %175 {offsets = [0, 32], sizes = [2, 32], strides = [1, 1]} : vector<2x128xf32> to vector<2x32xf32>
    %178 = vector.extract_strided_slice %175 {offsets = [0, 64], sizes = [2, 32], strides = [1, 1]} : vector<2x128xf32> to vector<2x32xf32>
    %179 = vector.extract_strided_slice %175 {offsets = [0, 96], sizes = [2, 32], strides = [1, 1]} : vector<2x128xf32> to vector<2x32xf32>
    %180 = arith.mulf %177, %157 : vector<2x32xf32>
    %181 = arith.mulf %176, %178 : vector<2x32xf32>
    %182 = arith.addf %180, %181 : vector<2x32xf32>
    %183 = math.tanh %182 : vector<2x32xf32>
    %184 = arith.mulf %179, %183 : vector<2x32xf32>
    %cst_51 = arith.constant dense<0.000000e+00> : vector<32xf32>
    %185 = vector.multi_reduction <add>, %184, %cst_51 [0] : vector<2x32xf32> to vector<32xf32>
    %186 = vector.shape_cast %185 : vector<32xf32> to vector<1x32xf32>
    %cst_52 = arith.constant 5.000000e-01 : f32
    %187 = vector.broadcast %cst_52 : f32 to vector<1x32xf32>
    %188 = arith.mulf %186, %187 : vector<1x32xf32>
    %c0_53 = arith.constant 0 : index
    %c128 = arith.constant 128 : index
    %189 = vector.load %arg2[%c0_53, %c128] : memref<1x256xf32, #tpu.memory_space<vmem>>, vector<1x32xf32>
    tpu.vector_store %arg2[%c0_53, %c128], %188 {strides = array<i32>} : memref<1x256xf32, #tpu.memory_space<vmem>>, vector<1x32xf32>,
    %cst_54 = arith.constant dense<0.000000e+00> : vector<2x128xf32>
    %190 = tpu.matmul %184, %0, %cst_54 {dimension_numbers = #tpu.dot_dimension_numbers<[1], [0], [0], [1], [0, 0, 1, 1], [], []>} : vector<2x32xf32>, vector<32x128xf32>, vector<2x128xf32> -> vector<2x128xf32>
    %191 = arith.addf %42, %190 : vector<2x128xf32>
    %cst_55 = arith.constant 5.000000e-01 : f32
    %192 = vector.broadcast %cst_55 : f32 to vector<2x128xf32>
    %193 = arith.mulf %192, %191 : vector<2x128xf32>
    %194 = arith.select %62, %191, %193 : vector<2x128xi1>, vector<2x128xf32>
    %195 = math.tanh %194 : vector<2x128xf32>
    %cst_56 = arith.constant 5.000000e-01 : f32
    %196 = vector.broadcast %cst_56 : f32 to vector<2x128xf32>
    %197 = arith.mulf %196, %195 : vector<2x128xf32>
    %cst_57 = arith.constant 5.000000e-01 : f32
    %198 = vector.broadcast %cst_57 : f32 to vector<2x128xf32>
    %199 = arith.addf %197, %198 : vector<2x128xf32>
    %200 = arith.select %62, %195, %199 : vector<2x128xi1>, vector<2x128xf32>
    %201 = vector.extract_strided_slice %200 {offsets = [0, 0], sizes = [2, 32], strides = [1, 1]} : vector<2x128xf32> to vector<2x32xf32>
    %202 = vector.extract_strided_slice %200 {offsets = [0, 32], sizes = [2, 32], strides = [1, 1]} : vector<2x128xf32> to vector<2x32xf32>
    %203 = vector.extract_strided_slice %200 {offsets = [0, 64], sizes = [2, 32], strides = [1, 1]} : vector<2x128xf32> to vector<2x32xf32>
    %204 = vector.extract_strided_slice %200 {offsets = [0, 96], sizes = [2, 32], strides = [1, 1]} : vector<2x128xf32> to vector<2x32xf32>
    %205 = arith.mulf %202, %182 : vector<2x32xf32>
    %206 = arith.mulf %201, %203 : vector<2x32xf32>
    %207 = arith.addf %205, %206 : vector<2x32xf32>
    %208 = math.tanh %207 : vector<2x32xf32>
    %209 = arith.mulf %204, %208 : vector<2x32xf32>
    %cst_58 = arith.constant dense<0.000000e+00> : vector<32xf32>
    %210 = vector.multi_reduction <add>, %209, %cst_58 [0] : vector<2x32xf32> to vector<32xf32>
    %211 = vector.shape_cast %210 : vector<32xf32> to vector<1x32xf32>
    %cst_59 = arith.constant 5.000000e-01 : f32
    %212 = vector.broadcast %cst_59 : f32 to vector<1x32xf32>
    %213 = arith.mulf %211, %212 : vector<1x32xf32>
    %c0_60 = arith.constant 0 : index
    %c160 = arith.constant 160 : index
    %214 = vector.load %arg2[%c0_60, %c160] : memref<1x256xf32, #tpu.memory_space<vmem>>, vector<1x32xf32>
    tpu.vector_store %arg2[%c0_60, %c160], %213 {strides = array<i32>} : memref<1x256xf32, #tpu.memory_space<vmem>>, vector<1x32xf32>,
    %cst_61 = arith.constant dense<0.000000e+00> : vector<2x128xf32>
    %215 = tpu.matmul %209, %0, %cst_61 {dimension_numbers = #tpu.dot_dimension_numbers<[1], [0], [0], [1], [0, 0, 1, 1], [], []>} : vector<2x32xf32>, vector<32x128xf32>, vector<2x128xf32> -> vector<2x128xf32>
    %216 = arith.addf %49, %215 : vector<2x128xf32>
    %cst_62 = arith.constant 5.000000e-01 : f32
    %217 = vector.broadcast %cst_62 : f32 to vector<2x128xf32>
    %218 = arith.mulf %217, %216 : vector<2x128xf32>
    %219 = arith.select %62, %216, %218 : vector<2x128xi1>, vector<2x128xf32>
    %220 = math.tanh %219 : vector<2x128xf32>
    %cst_63 = arith.constant 5.000000e-01 : f32
    %221 = vector.broadcast %cst_63 : f32 to vector<2x128xf32>
    %222 = arith.mulf %221, %220 : vector<2x128xf32>
    %cst_64 = arith.constant 5.000000e-01 : f32
    %223 = vector.broadcast %cst_64 : f32 to vector<2x128xf32>
    %224 = arith.addf %222, %223 : vector<2x128xf32>
    %225 = arith.select %62, %220, %224 : vector<2x128xi1>, vector<2x128xf32>
    %226 = vector.extract_strided_slice %225 {offsets = [0, 0], sizes = [2, 32], strides = [1, 1]} : vector<2x128xf32> to vector<2x32xf32>
    %227 = vector.extract_strided_slice %225 {offsets = [0, 32], sizes = [2, 32], strides = [1, 1]} : vector<2x128xf32> to vector<2x32xf32>
    %228 = vector.extract_strided_slice %225 {offsets = [0, 64], sizes = [2, 32], strides = [1, 1]} : vector<2x128xf32> to vector<2x32xf32>
    %229 = vector.extract_strided_slice %225 {offsets = [0, 96], sizes = [2, 32], strides = [1, 1]} : vector<2x128xf32> to vector<2x32xf32>
    %230 = arith.mulf %227, %207 : vector<2x32xf32>
    %231 = arith.mulf %226, %228 : vector<2x32xf32>
    %232 = arith.addf %230, %231 : vector<2x32xf32>
    %233 = math.tanh %232 : vector<2x32xf32>
    %234 = arith.mulf %229, %233 : vector<2x32xf32>
    %cst_65 = arith.constant dense<0.000000e+00> : vector<32xf32>
    %235 = vector.multi_reduction <add>, %234, %cst_65 [0] : vector<2x32xf32> to vector<32xf32>
    %236 = vector.shape_cast %235 : vector<32xf32> to vector<1x32xf32>
    %cst_66 = arith.constant 5.000000e-01 : f32
    %237 = vector.broadcast %cst_66 : f32 to vector<1x32xf32>
    %238 = arith.mulf %236, %237 : vector<1x32xf32>
    %c0_67 = arith.constant 0 : index
    %c192 = arith.constant 192 : index
    %239 = vector.load %arg2[%c0_67, %c192] : memref<1x256xf32, #tpu.memory_space<vmem>>, vector<1x32xf32>
    tpu.vector_store %arg2[%c0_67, %c192], %238 {strides = array<i32>} : memref<1x256xf32, #tpu.memory_space<vmem>>, vector<1x32xf32>,
    %cst_68 = arith.constant dense<0.000000e+00> : vector<2x128xf32>
    %240 = tpu.matmul %234, %0, %cst_68 {dimension_numbers = #tpu.dot_dimension_numbers<[1], [0], [0], [1], [0, 0, 1, 1], [], []>} : vector<2x32xf32>, vector<32x128xf32>, vector<2x128xf32> -> vector<2x128xf32>
    %241 = arith.addf %56, %240 : vector<2x128xf32>
    %cst_69 = arith.constant 5.000000e-01 : f32
    %242 = vector.broadcast %cst_69 : f32 to vector<2x128xf32>
    %243 = arith.mulf %242, %241 : vector<2x128xf32>
    %244 = arith.select %62, %241, %243 : vector<2x128xi1>, vector<2x128xf32>
    %245 = math.tanh %244 : vector<2x128xf32>
    %cst_70 = arith.constant 5.000000e-01 : f32
    %246 = vector.broadcast %cst_70 : f32 to vector<2x128xf32>
    %247 = arith.mulf %246, %245 : vector<2x128xf32>
    %cst_71 = arith.constant 5.000000e-01 : f32
    %248 = vector.broadcast %cst_71 : f32 to vector<2x128xf32>
    %249 = arith.addf %247, %248 : vector<2x128xf32>
    %250 = arith.select %62, %245, %249 : vector<2x128xi1>, vector<2x128xf32>
    %251 = vector.extract_strided_slice %250 {offsets = [0, 0], sizes = [2, 32], strides = [1, 1]} : vector<2x128xf32> to vector<2x32xf32>
    %252 = vector.extract_strided_slice %250 {offsets = [0, 32], sizes = [2, 32], strides = [1, 1]} : vector<2x128xf32> to vector<2x32xf32>
    %253 = vector.extract_strided_slice %250 {offsets = [0, 64], sizes = [2, 32], strides = [1, 1]} : vector<2x128xf32> to vector<2x32xf32>
    %254 = vector.extract_strided_slice %250 {offsets = [0, 96], sizes = [2, 32], strides = [1, 1]} : vector<2x128xf32> to vector<2x32xf32>
    %255 = arith.mulf %252, %232 : vector<2x32xf32>
    %256 = arith.mulf %251, %253 : vector<2x32xf32>
    %257 = arith.addf %255, %256 : vector<2x32xf32>
    %258 = math.tanh %257 : vector<2x32xf32>
    %259 = arith.mulf %254, %258 : vector<2x32xf32>
    %cst_72 = arith.constant dense<0.000000e+00> : vector<32xf32>
    %260 = vector.multi_reduction <add>, %259, %cst_72 [0] : vector<2x32xf32> to vector<32xf32>
    %261 = vector.shape_cast %260 : vector<32xf32> to vector<1x32xf32>
    %cst_73 = arith.constant 5.000000e-01 : f32
    %262 = vector.broadcast %cst_73 : f32 to vector<1x32xf32>
    %263 = arith.mulf %261, %262 : vector<1x32xf32>
    %c0_74 = arith.constant 0 : index
    %c224 = arith.constant 224 : index
    %264 = vector.load %arg2[%c0_74, %c224] : memref<1x256xf32, #tpu.memory_space<vmem>>, vector<1x32xf32>
    tpu.vector_store %arg2[%c0_74, %c224], %263 {strides = array<i32>} : memref<1x256xf32, #tpu.memory_space<vmem>>, vector<1x32xf32>,
    return
  }
}

</mosaic_0001>

<llo_original>
// kernel: lstm_encoder_fwd.1
$region0: #{lstm_encoder_fwd.1}
  #allocation0 [shape = 'u32[]', space=smem, size = 0x4, offset = 0x4, fixed_abs, tag = 'smem constant byte address 0x4 - core index']
  #allocation1 [shape = 'u32[144,128]{1,0:T(1,128)}', space=vmem, size = 0x12000, scoped, tag = 'internal scratch']
  %s0 = inlined_call_operand.vmem [shape: s32[16], index: 0, kind: input, shape index: {}]
  %s1 = inlined_call_operand.hbm [shape: f32[88,128], index: 1, kind: input, shape index: {}]
  %s2 = inlined_call_operand.vmem [shape: f32[1,256], index: 2, kind: output, shape index: {}]
  %s3 = sld [smem:[#allocation0]]
  $region26: #{lstm_encoder_fwd.1} parent=0
    _
  %s5 = ssub.s32 1, %s3
  %s6 = scalar_select 0, %s5, %s3
  $region1: #{lstm_encoder_fwd.1} parent=0
    #allocation2 [shape = 'u8[512]{0}', space=smem, size = 0x200, scoped, tag = 'input window, operand 0, single buffered']
    #allocation3 [shape = 's32[1]{0}', space=sflag, size = 0x4, scoped, tag = 'scoped memory for lstm_encoder_fwd.1']
    #allocation4 [shape = 's32[1]{0}', space=sflag, size = 0x4, scoped, tag = 'scoped memory for lstm_encoder_fwd.1']
    #allocation5 [shape = 'u8[45056]{0}', space=vmem, size = 0xb000, scoped, tag = 'input window, operand 1, single buffered']
    %7 = vsyncpa [#allocation4], 0
    %8 = vsyncpa [#allocation3], 0
    // Predicated region
    $region2: #{lstm_encoder_fwd.1} parent=1 // pred_check
      _
    $region3: #{lstm_encoder_fwd.1} parent=1 // pred_check_branch
      %10 = sbr.rel (0) target = $region5
    $region4: #{lstm_encoder_fwd.1} parent=1 // pred_region
      %s12 = ssub.s32 16, 16
      %13 = vsyncadd [#allocation4], %s12
      %s15 = sshll.u32 %s0, 4
      %s16 = int_to_ptr.vmem [resolvable:$true] %s15
      %18 = dma.vmem_to_smem %s16, 16, [#allocation2], [#allocation4]
    $region5: #{lstm_encoder_fwd.1} parent=1 // pred_fallthru
      _
    // Predicated region
    $region6: #{lstm_encoder_fwd.1} parent=1 // pred_check
      _
    $region7: #{lstm_encoder_fwd.1} parent=1 // pred_check_branch
      %20 = sbr.rel (0) target = $region9
    $region8: #{lstm_encoder_fwd.1} parent=1 // pred_region
      %s22 = ssub.s32 1408, 1408
      %23 = vsyncadd [#allocation3], %s22
      %s24 = sshll.u32 [#allocation5], 4
      %s25 = int_to_ptr.vmem [resolvable:$true] %s24
      %30 = dma.hbm_to_vmem [thread:$0]  %s1, 1408, %s25, [#allocation3], 128, 128, 8
    $region9: #{lstm_encoder_fwd.1} parent=1 // pred_fallthru
      _
    // Predicated region
    $region10: #{lstm_encoder_fwd.1} parent=1 // pred_check
      _
    $region11: #{lstm_encoder_fwd.1} parent=1 // pred_check_branch
      %32 = sbr.rel (0) target = $region13
    $region12: #{lstm_encoder_fwd.1} parent=1 // pred_region
      %33 = dma.done [#allocation4], 16
    $region13: #{lstm_encoder_fwd.1} parent=1 // pred_fallthru
      _
    // Predicated region
    $region14: #{lstm_encoder_fwd.1} parent=1 // pred_check
      _
    $region15: #{lstm_encoder_fwd.1} parent=1 // pred_check_branch
      %35 = sbr.rel (0) target = $region17
    $region16: #{lstm_encoder_fwd.1} parent=1 // pred_region
      %36 = dma.done [#allocation3], 1408
    $region17: #{lstm_encoder_fwd.1} parent=1 // pred_fallthru
      _
    %37 = sfence
    %v38 = vld [vmem:[#allocation5 + $0x38] sm:$0xff]
    %v39 = vld [vmem:[#allocation5 + $0x40] sm:$0xff]
    %v40 = vld [vmem:[#allocation5 + $0x48] sm:$0xff]
    %v41 = vld [vmem:[#allocation5 + $0x50] sm:$0xff]
    %s42 = sld [smem:[#allocation2]]
    %s43 = scalar_lea.vmem [#allocation5], %s42
    %v44 = vld [vmem:[%s43] sm:$0x1]
    %s45 = sld [smem:[#allocation2 + $0x1]]
    %s46 = scalar_lea.vmem [#allocation5], %s45
    %v47 = vld [vmem:[%s46] sm:$0x1]
    %v49 = vrot.slane %v47, 7
    %vm51 = vcmask 1040384
    %v52 = vsel %vm51, %v44, %v49
    %s53 = sld [smem:[#allocation2 + $0x2]]
    %s54 = scalar_lea.vmem [#allocation5], %s53
    %v55 = vld [vmem:[%s54] sm:$0x1]
    %s56 = sld [smem:[#allocation2 + $0x3]]
    %s57 = scalar_lea.vmem [#allocation5], %s56
    %v58 = vld [vmem:[%s57] sm:$0x1]
    %v60 = vrot.slane %v58, 7
    %v62 = vsel %vm51, %v55, %v60
    %s63 = sld [smem:[#allocation2 + $0x4]]
    %s64 = scalar_lea.vmem [#allocation5], %s63
    %v65 = vld [vmem:[%s64] sm:$0x1]
    %s66 = sld [smem:[#allocation2 + $0x5]]
    %s67 = scalar_lea.vmem [#allocation5], %s66
    %v68 = vld [vmem:[%s67] sm:$0x1]
    %v70 = vrot.slane %v68, 7
    %v72 = vsel %vm51, %v65, %v70
    %s73 = sld [smem:[#allocation2 + $0x6]]
    %s74 = scalar_lea.vmem [#allocation5], %s73
    %v75 = vld [vmem:[%s74] sm:$0x1]
    %s76 = sld [smem:[#allocation2 + $0x7]]
    %s77 = scalar_lea.vmem [#allocation5], %s76
    %v78 = vld [vmem:[%s77] sm:$0x1]
    %v80 = vrot.slane %v78, 7
    %v82 = vsel %vm51, %v75, %v80
    %s83 = sld [smem:[#allocation2 + $0x8]]
    %s84 = scalar_lea.vmem [#allocation5], %s83
    %v85 = vld [vmem:[%s84] sm:$0x1]
    %s86 = sld [smem:[#allocation2 + $0x9]]
    %s87 = scalar_lea.vmem [#allocation5], %s86
    %v88 = vld [vmem:[%s87] sm:$0x1]
    %v90 = vrot.slane %v88, 7
    %v92 = vsel %vm51, %v85, %v90
    %s93 = sld [smem:[#allocation2 + $0xa]]
    %s94 = scalar_lea.vmem [#allocation5], %s93
    %v95 = vld [vmem:[%s94] sm:$0x1]
    %s96 = sld [smem:[#allocation2 + $0xb]]
    %s97 = scalar_lea.vmem [#allocation5], %s96
    %v98 = vld [vmem:[%s97] sm:$0x1]
    %v100 = vrot.slane %v98, 7
    %v102 = vsel %vm51, %v95, %v100
    %s103 = sld [smem:[#allocation2 + $0xc]]
    %s104 = scalar_lea.vmem [#allocation5], %s103
    %v105 = vld [vmem:[%s104] sm:$0x1]
    %s106 = sld [smem:[#allocation2 + $0xd]]
    %s107 = scalar_lea.vmem [#allocation5], %s106
    %v108 = vld [vmem:[%s107] sm:$0x1]
    %v110 = vrot.slane %v108, 7
    %v112 = vsel %vm51, %v105, %v110
    %s113 = sld [smem:[#allocation2 + $0xe]]
    %s114 = scalar_lea.vmem [#allocation5], %s113
    %v115 = vld [vmem:[%s114] sm:$0x1]
    %s116 = sld [smem:[#allocation2 + $0xf]]
    %s117 = scalar_lea.vmem [#allocation5], %s116
    %v118 = vld [vmem:[%s117] sm:$0x1]
    %v120 = vrot.slane %v118, 7
    %v122 = vsel %vm51, %v115, %v120
    %v123 = vlaneseq
    %v124 = vand.u32 %v123, 127
    %vm125 = vcmp.ge.s32.totalorder %v124, 64
    %vm126 = vcmp.lt.s32.totalorder %v124, 96
    %vm127 = vmand %vm125, %vm126
    %vm128 = vcmask 261120
    %v130 = vsel %vm128, 0.0, 0
    %132 = vmatprep.subr.mxu0 0.0
    %133 = vmatpush1.msra.mxu0 %v38
    %134 = vmatprep.subr.mxu0 0.0
    %135 = vmatpush1.msra.mxu0 %v39
    %136 = vmatprep.subr.mxu0 0.0
    %137 = vmatpush1.msra.mxu0 %v40
    %138 = vmatprep.subr.mxu0 0.0
    %139 = vmatpush1.msra.mxu0 %v41
    %140 = vmatprep.subr.mxu0 0.0
    %141 = vmatpush1.msra.mxu0 0.0
    %142 = vmatprep.subr.mxu0 0.0
    %143 = vmatpush1.msra.mxu0 0.0
    %144 = vmatprep.subr.mxu0 0.0
    %145 = vmatpush1.msra.mxu0 0.0
    %146 = vmatprep.subr.mxu0 0.0
    %147 = vmatpush1.msra.mxu0 0.0
    %148 = vmatprep.subr.mxu0 0.0
    %149 = vmatpush1.msra.mxu0 0.0
    %150 = vmatprep.subr.mxu0 0.0
    %151 = vmatpush1.msra.mxu0 0.0
    %152 = vmatprep.subr.mxu0 0.0
    %153 = vmatpush1.msra.mxu0 0.0
    %154 = vmatprep.subr.mxu0 0.0
    %155 = vmatpush1.msra.mxu0 0.0
    %156 = vmatprep.subr.mxu0 0.0
    %157 = vmatpush1.msra.mxu0 0.0
    %158 = vmatprep.subr.mxu0 0.0
    %159 = vmatpush1.msra.mxu0 0.0
    %160 = vmatprep.subr.mxu0 0.0
    %161 = vmatpush1.msra.mxu0 0.0
    %162 = vmatprep.subr.mxu0 0.0
    %163 = vmatpush1.msra.mxu0 0.0
    %164 = vmatprep.subr.mxu0 0.0
    %165 = vmatpush1.msra.mxu0 0.0
    %166 = vmatprep.subr.mxu0 0.0
    %167 = vmatpush1.msra.mxu0 0.0
    %168 = vmatprep.subr.mxu0 0.0
    %169 = vmatpush1.msra.mxu0 0.0
    %170 = vmatprep.subr.mxu0 0.0
    %171 = vmatpush1.msra.mxu0 0.0
    %172 = vmatprep.subr.mxu0 0.0
    %173 = vmatpush1.msra.mxu0 0.0
    %174 = vmatprep.subr.mxu0 0.0
    %175 = vmatpush1.msra.mxu0 0.0
    %176 = vmatprep.subr.mxu0 0.0
    %177 = vmatpush1.msra.mxu0 0.0
    %178 = vmatprep.subr.mxu0 0.0
    %179 = vmatpush1.msra.mxu0 0.0
    %180 = vmatprep.subr.mxu0 0.0
    %181 = vmatpush1.msra.mxu0 0.0
    %182 = vmatprep.subr.mxu0 0.0
    %183 = vmatpush1.msra.mxu0 0.0
    %184 = vmatprep.subr.mxu0 0.0
    %185 = vmatpush1.msra.mxu0 0.0
    %186 = vmatprep.subr.mxu0 0.0
    %187 = vmatpush1.msra.mxu0 0.0
    %188 = vmatprep.subr.mxu0 0.0
    %189 = vmatpush1.msra.mxu0 0.0
    %190 = vmatprep.subr.mxu0 0.0
    %191 = vmatpush1.msra.mxu0 0.0
    %192 = vmatprep.subr.mxu0 0.0
    %193 = vmatpush1.msra.mxu0 0.0
    %194 = vmatprep.subr.mxu0 0.0
    %195 = vmatpush1.msra.mxu0 0.0
    %196 = vmatprep.mubr.f32.mxu0 0.0
    %197 = vmatmul.mubr.f32.gmra.mrb[0].mxu0 %v130
    %v198 = vpop.f32.mrb[0].mxu0
    %v199 = vadd.f32 0.0, %v198
    %v200 = vpop.f32.mrb[0].mxu0
    %201 = vdwg.mxu0
    %v202 = vadd.f32 %v52, %v199
    %v203 = vmul.f32 %v202, 0.5
    %v204 = vsel %vm127, %v202, %v203
    %v205 = vtanh.pop %v204
    %v206 = vmul.f32 %v205, 0.5
    %v207 = vadd.f32 %v206, 0.5
    %v208 = vsel %vm127, %v205, %v207
    %v209 = vmul.f32 %v208, 0.0
    %211 = vrot.lane.b32.xlu0 %v208, 64
    %v212 = vpop.permute.xlu0 %211
    %v214 = vmul.f32 %v208, %v212
    %216 = vrot.lane.b32.xlu0 %v214, 32
    %v217 = vpop.permute.xlu0 %216
    %v219 = vadd.f32 %v209, %v217
    %v220 = vtanh.pop %v219
    %222 = vrot.lane.b32.xlu0 %v220, 64
    %v223 = vpop.permute.xlu0 %222
    %v225 = vmul.f32 %v208, %v223
    %vm226 = vcmask 1042176
    %v227 = vsel %vm226, %v225, 0.0
    %v228 = vrot.slane %v227, 4
    %v229 = vadd.f32 %v227, %v228
    %v230 = vrot.slane %v229, 2
    %v231 = vadd.f32 %v229, %v230
    %v232 = vrot.slane %v231, 1
    %v233 = vadd.f32 %v231, %v232
    %v234 = vmul.f32 %v233, 0.5
    %v237 = vunpack.c.l.s4 1966171168
    %v238 = vunpack.c.0.s8 %v237
    %v239 = vlaneseq
    %v240 = vshrl.u32 %v239, 7
    %v241 = vsub.s32 %v238, %v240
    %v242 = vrot.slane %v234, %v241
    %v244 = vunpack.c.l.s4 1966171168
    %v245 = vunpack.c.0.s8 %v244
    %v246 = vlaneseq
    %v247 = vshrl.u32 %v246, 7
    %v248 = vsub.s32 %v245, %v247
    %v249 = vrot.slane %v242, %v248
    %250 = vrot.lane.b32.xlu0 %v249, 32
    %v251 = vpop.permute.xlu0 %250
    %v253 = vlaneseq
    %vm254 = vcmp.ge.s32.totalorder %v253, 0
    %vm255 = vcmp.lt.s32.totalorder %v253, 32
    %vm256 = vmand %vm254, %vm255
    %257 = vst.msk [vmem:[%s2] sm:$0x1] %vm256, %v251
    %259 = vrot.lane.b32.xlu0 %v225, 32
    %v260 = vpop.permute.xlu0 %259
    %v261 = vsel %vm128, %v260, 0
    %263 = vmatprep.subr.mxu0 0.0
    %264 = vmatpush1.msra.mxu0 %v38
    %265 = vmatprep.subr.mxu0 0.0
    %266 = vmatpush1.msra.mxu0 %v39
    %267 = vmatprep.subr.mxu0 0.0
    %268 = vmatpush1.msra.mxu0 %v40
    %269 = vmatprep.subr.mxu0 0.0
    %270 = vmatpush1.msra.mxu0 %v41
    %271 = vmatprep.subr.mxu0 0.0
    %272 = vmatpush1.msra.mxu0 0.0
    %273 = vmatprep.subr.mxu0 0.0
    %274 = vmatpush1.msra.mxu0 0.0
    %275 = vmatprep.subr.mxu0 0.0
    %276 = vmatpush1.msra.mxu0 0.0
    %277 = vmatprep.subr.mxu0 0.0
    %278 = vmatpush1.msra.mxu0 0.0
    %279 = vmatprep.subr.mxu0 0.0
    %280 = vmatpush1.msra.mxu0 0.0
    %281 = vmatprep.subr.mxu0 0.0
    %282 = vmatpush1.msra.mxu0 0.0
    %283 = vmatprep.subr.mxu0 0.0
    %284 = vmatpush1.msra.mxu0 0.0
    %285 = vmatprep.subr.mxu0 0.0
    %286 = vmatpush1.msra.mxu0 0.0
    %287 = vmatprep.subr.mxu0 0.0
    %288 = vmatpush1.msra.mxu0 0.0
    %289 = vmatprep.subr.mxu0 0.0
    %290 = vmatpush1.msra.mxu0 0.0
    %291 = vmatprep.subr.mxu0 0.0
    %292 = vmatpush1.msra.mxu0 0.0
    %293 = vmatprep.subr.mxu0 0.0
    %294 = vmatpush1.msra.mxu0 0.0
    %295 = vmatprep.subr.mxu0 0.0
    %296 = vmatpush1.msra.mxu0 0.0
    %297 = vmatprep.subr.mxu0 0.0
    %298 = vmatpush1.msra.mxu0 0.0
    %299 = vmatprep.subr.mxu0 0.0
    %300 = vmatpush1.msra.mxu0 0.0
    %301 = vmatprep.subr.mxu0 0.0
    %302 = vmatpush1.msra.mxu0 0.0
    %303 = vmatprep.subr.mxu0 0.0
    %304 = vmatpush1.msra.mxu0 0.0
    %305 = vmatprep.subr.mxu0 0.0
    %306 = vmatpush1.msra.mxu0 0.0
    %307 = vmatprep.subr.mxu0 0.0
    %308 = vmatpush1.msra.mxu0 0.0
    %309 = vmatprep.subr.mxu0 0.0
    %310 = vmatpush1.msra.mxu0 0.0
    %311 = vmatprep.subr.mxu0 0.0
    %312 = vmatpush1.msra.mxu0 0.0
    %313 = vmatprep.subr.mxu0 0.0
    %314 = vmatpush1.msra.mxu0 0.0
    %315 = vmatprep.subr.mxu0 0.0
    %316 = vmatpush1.msra.mxu0 0.0
    %317 = vmatprep.subr.mxu0 0.0
    %318 = vmatpush1.msra.mxu0 0.0
    %319 = vmatprep.subr.mxu0 0.0
    %320 = vmatpush1.msra.mxu0 0.0
    %321 = vmatprep.subr.mxu0 0.0
    %322 = vmatpush1.msra.mxu0 0.0
    %323 = vmatprep.subr.mxu0 0.0
    %324 = vmatpush1.msra.mxu0 0.0
    %325 = vmatprep.subr.mxu0 0.0
    %326 = vmatpush1.msra.mxu0 0.0
    %327 = vmatprep.mubr.f32.mxu0 0.0
    %328 = vmatmul.mubr.f32.gmra.mrb[0].mxu0 %v261
    %v329 = vpop.f32.mrb[0].mxu0
    %v330 = vadd.f32 0.0, %v329
    %v331 = vpop.f32.mrb[0].mxu0
    %332 = vdwg.mxu0
    %v333 = vadd.f32 %v62, %v330
    %v334 = vmul.f32 %v333, 0.5
    %v335 = vsel %vm127, %v333, %v334
    %v336 = vtanh.pop %v335
    %v337 = vmul.f32 %v336, 0.5
    %v338 = vadd.f32 %v337, 0.5
    %v339 = vsel %vm127, %v336, %v338
    %v340 = vmul.f32 %v339, %v219
    %342 = vrot.lane.b32.xlu0 %v339, 64
    %v343 = vpop.permute.xlu0 %342
    %v345 = vmul.f32 %v339, %v343
    %347 = vrot.lane.b32.xlu0 %v345, 32
    %v348 = vpop.permute.xlu0 %347
    %v350 = vadd.f32 %v340, %v348
    %v351 = vtanh.pop %v350
    %353 = vrot.lane.b32.xlu0 %v351, 64
    %v354 = vpop.permute.xlu0 %353
    %v356 = vmul.f32 %v339, %v354
    %v357 = vsel %vm226, %v356, 0.0
    %v358 = vrot.slane %v357, 4
    %v359 = vadd.f32 %v357, %v358
    %v360 = vrot.slane %v359, 2
    %v361 = vadd.f32 %v359, %v360
    %v362 = vrot.slane %v361, 1
    %v363 = vadd.f32 %v361, %v362
    %v364 = vmul.f32 %v363, 0.5
    %v367 = vunpack.c.l.s4 1966171168
    %v368 = vunpack.c.0.s8 %v367
    %v369 = vlaneseq
    %v370 = vshrl.u32 %v369, 7
    %v371 = vsub.s32 %v368, %v370
    %v372 = vrot.slane %v364, %v371
    %v374 = vunpack.c.l.s4 1966171168
    %v375 = vunpack.c.0.s8 %v374
    %v376 = vlaneseq
    %v377 = vshrl.u32 %v376, 7
    %v378 = vsub.s32 %v375, %v377
    %v379 = vrot.slane %v372, %v378
    %380 = vrot.lane.b32.xlu0 %v379, 64
    %v381 = vpop.permute.xlu0 %380
    %vm383 = vcmp.ge.s32.totalorder %v253, 32
    %vm384 = vcmp.lt.s32.totalorder %v253, 64
    %vm385 = vmand %vm383, %vm384
    %386 = vst.msk [vmem:[%s2] sm:$0x1] %vm385, %v381
    %388 = vrot.lane.b32.xlu0 %v356, 32
    %v389 = vpop.permute.xlu0 %388
    %v390 = vsel %vm128, %v389, 0
    %392 = vmatprep.subr.mxu0 0.0
    %393 = vmatpush1.msra.mxu0 %v38
    %394 = vmatprep.subr.mxu0 0.0
    %395 = vmatpush1.msra.mxu0 %v39
    %396 = vmatprep.subr.mxu0 0.0
    %397 = vmatpush1.msra.mxu0 %v40
    %398 = vmatprep.subr.mxu0 0.0
    %399 = vmatpush1.msra.mxu0 %v41
    %400 = vmatprep.subr.mxu0 0.0
    %401 = vmatpush1.msra.mxu0 0.0
    %402 = vmatprep.subr.mxu0 0.0
    %403 = vmatpush1.msra.mxu0 0.0
    %404 = vmatprep.subr.mxu0 0.0
    %405 = vmatpush1.msra.mxu0 0.0
    %406 = vmatprep.subr.mxu0 0.0
    %407 = vmatpush1.msra.mxu0 0.0
    %408 = vmatprep.subr.mxu0 0.0
    %409 = vmatpush1.msra.mxu0 0.0
    %410 = vmatprep.subr.mxu0 0.0
    %411 = vmatpush1.msra.mxu0 0.0
    %412 = vmatprep.subr.mxu0 0.0
    %413 = vmatpush1.msra.mxu0 0.0
    %414 = vmatprep.subr.mxu0 0.0
    %415 = vmatpush1.msra.mxu0 0.0
    %416 = vmatprep.subr.mxu0 0.0
    %417 = vmatpush1.msra.mxu0 0.0
    %418 = vmatprep.subr.mxu0 0.0
    %419 = vmatpush1.msra.mxu0 0.0
    %420 = vmatprep.subr.mxu0 0.0
    %421 = vmatpush1.msra.mxu0 0.0
    %422 = vmatprep.subr.mxu0 0.0
    %423 = vmatpush1.msra.mxu0 0.0
    %424 = vmatprep.subr.mxu0 0.0
    %425 = vmatpush1.msra.mxu0 0.0
    %426 = vmatprep.subr.mxu0 0.0
    %427 = vmatpush1.msra.mxu0 0.0
    %428 = vmatprep.subr.mxu0 0.0
    %429 = vmatpush1.msra.mxu0 0.0
    %430 = vmatprep.subr.mxu0 0.0
    %431 = vmatpush1.msra.mxu0 0.0
    %432 = vmatprep.subr.mxu0 0.0
    %433 = vmatpush1.msra.mxu0 0.0
    %434 = vmatprep.subr.mxu0 0.0
    %435 = vmatpush1.msra.mxu0 0.0
    %436 = vmatprep.subr.mxu0 0.0
    %437 = vmatpush1.msra.mxu0 0.0
    %438 = vmatprep.subr.mxu0 0.0
    %439 = vmatpush1.msra.mxu0 0.0
    %440 = vmatprep.subr.mxu0 0.0
    %441 = vmatpush1.msra.mxu0 0.0
    %442 = vmatprep.subr.mxu0 0.0
    %443 = vmatpush1.msra.mxu0 0.0
    %444 = vmatprep.subr.mxu0 0.0
    %445 = vmatpush1.msra.mxu0 0.0
    %446 = vmatprep.subr.mxu0 0.0
    %447 = vmatpush1.msra.mxu0 0.0
    %448 = vmatprep.subr.mxu0 0.0
    %449 = vmatpush1.msra.mxu0 0.0
    %450 = vmatprep.subr.mxu0 0.0
    %451 = vmatpush1.msra.mxu0 0.0
    %452 = vmatprep.subr.mxu0 0.0
    %453 = vmatpush1.msra.mxu0 0.0
    %454 = vmatprep.subr.mxu0 0.0
    %455 = vmatpush1.msra.mxu0 0.0
    %456 = vmatprep.mubr.f32.mxu0 0.0
    %457 = vmatmul.mubr.f32.gmra.mrb[0].mxu0 %v390
    %v458 = vpop.f32.mrb[0].mxu0
    %v459 = vadd.f32 0.0, %v458
    %v460 = vpop.f32.mrb[0].mxu0
    %461 = vdwg.mxu0
    %v462 = vadd.f32 %v72, %v459
    %v463 = vmul.f32 %v462, 0.5
    %v464 = vsel %vm127, %v462, %v463
    %v465 = vtanh.pop %v464
    %v466 = vmul.f32 %v465, 0.5
    %v467 = vadd.f32 %v466, 0.5
    %v468 = vsel %vm127, %v465, %v467
    %v469 = vmul.f32 %v468, %v350
    %471 = vrot.lane.b32.xlu0 %v468, 64
    %v472 = vpop.permute.xlu0 %471
    %v474 = vmul.f32 %v468, %v472
    %476 = vrot.lane.b32.xlu0 %v474, 32
    %v477 = vpop.permute.xlu0 %476
    %v479 = vadd.f32 %v469, %v477
    %v480 = vtanh.pop %v479
    %482 = vrot.lane.b32.xlu0 %v480, 64
    %v483 = vpop.permute.xlu0 %482
    %v485 = vmul.f32 %v468, %v483
    %v486 = vsel %vm226, %v485, 0.0
    %v487 = vrot.slane %v486, 4
    %v488 = vadd.f32 %v486, %v487
    %v489 = vrot.slane %v488, 2
    %v490 = vadd.f32 %v488, %v489
    %v491 = vrot.slane %v490, 1
    %v492 = vadd.f32 %v490, %v491
    %v493 = vmul.f32 %v492, 0.5
    %v496 = vunpack.c.l.s4 1966171168
    %v497 = vunpack.c.0.s8 %v496
    %v498 = vlaneseq
    %v499 = vshrl.u32 %v498, 7
    %v500 = vsub.s32 %v497, %v499
    %v501 = vrot.slane %v493, %v500
    %v503 = vunpack.c.l.s4 1966171168
    %v504 = vunpack.c.0.s8 %v503
    %v505 = vlaneseq
    %v506 = vshrl.u32 %v505, 7
    %v507 = vsub.s32 %v504, %v506
    %v508 = vrot.slane %v501, %v507
    %509 = vrot.lane.b32.xlu0 %v508, 96
    %v510 = vpop.permute.xlu0 %509
    %vm512 = vcmp.ge.s32.totalorder %v253, 64
    %vm513 = vcmp.lt.s32.totalorder %v253, 96
    %vm514 = vmand %vm512, %vm513
    %515 = vst.msk [vmem:[%s2] sm:$0x1] %vm514, %v510
    %517 = vrot.lane.b32.xlu0 %v485, 32
    %v518 = vpop.permute.xlu0 %517
    %v519 = vsel %vm128, %v518, 0
    %521 = vmatprep.subr.mxu0 0.0
    %522 = vmatpush1.msra.mxu0 %v38
    %523 = vmatprep.subr.mxu0 0.0
    %524 = vmatpush1.msra.mxu0 %v39
    %525 = vmatprep.subr.mxu0 0.0
    %526 = vmatpush1.msra.mxu0 %v40
    %527 = vmatprep.subr.mxu0 0.0
    %528 = vmatpush1.msra.mxu0 %v41
    %529 = vmatprep.subr.mxu0 0.0
    %530 = vmatpush1.msra.mxu0 0.0
    %531 = vmatprep.subr.mxu0 0.0
    %532 = vmatpush1.msra.mxu0 0.0
    %533 = vmatprep.subr.mxu0 0.0
    %534 = vmatpush1.msra.mxu0 0.0
    %535 = vmatprep.subr.mxu0 0.0
    %536 = vmatpush1.msra.mxu0 0.0
    %537 = vmatprep.subr.mxu0 0.0
    %538 = vmatpush1.msra.mxu0 0.0
    %539 = vmatprep.subr.mxu0 0.0
    %540 = vmatpush1.msra.mxu0 0.0
    %541 = vmatprep.subr.mxu0 0.0
    %542 = vmatpush1.msra.mxu0 0.0
    %543 = vmatprep.subr.mxu0 0.0
    %544 = vmatpush1.msra.mxu0 0.0
    %545 = vmatprep.subr.mxu0 0.0
    %546 = vmatpush1.msra.mxu0 0.0
    %547 = vmatprep.subr.mxu0 0.0
    %548 = vmatpush1.msra.mxu0 0.0
    %549 = vmatprep.subr.mxu0 0.0
    %550 = vmatpush1.msra.mxu0 0.0
    %551 = vmatprep.subr.mxu0 0.0
    %552 = vmatpush1.msra.mxu0 0.0
    %553 = vmatprep.subr.mxu0 0.0
    %554 = vmatpush1.msra.mxu0 0.0
    %555 = vmatprep.subr.mxu0 0.0
    %556 = vmatpush1.msra.mxu0 0.0
    %557 = vmatprep.subr.mxu0 0.0
    %558 = vmatpush1.msra.mxu0 0.0
    %559 = vmatprep.subr.mxu0 0.0
    %560 = vmatpush1.msra.mxu0 0.0
    %561 = vmatprep.subr.mxu0 0.0
    %562 = vmatpush1.msra.mxu0 0.0
    %563 = vmatprep.subr.mxu0 0.0
    %564 = vmatpush1.msra.mxu0 0.0
    %565 = vmatprep.subr.mxu0 0.0
    %566 = vmatpush1.msra.mxu0 0.0
    %567 = vmatprep.subr.mxu0 0.0
    %568 = vmatpush1.msra.mxu0 0.0
    %569 = vmatprep.subr.mxu0 0.0
    %570 = vmatpush1.msra.mxu0 0.0
    %571 = vmatprep.subr.mxu0 0.0
    %572 = vmatpush1.msra.mxu0 0.0
    %573 = vmatprep.subr.mxu0 0.0
    %574 = vmatpush1.msra.mxu0 0.0
    %575 = vmatprep.subr.mxu0 0.0
    %576 = vmatpush1.msra.mxu0 0.0
    %577 = vmatprep.subr.mxu0 0.0
    %578 = vmatpush1.msra.mxu0 0.0
    %579 = vmatprep.subr.mxu0 0.0
    %580 = vmatpush1.msra.mxu0 0.0
    %581 = vmatprep.subr.mxu0 0.0
    %582 = vmatpush1.msra.mxu0 0.0
    %583 = vmatprep.subr.mxu0 0.0
    %584 = vmatpush1.msra.mxu0 0.0
    %585 = vmatprep.mubr.f32.mxu0 0.0
    %586 = vmatmul.mubr.f32.gmra.mrb[0].mxu0 %v519
    %v587 = vpop.f32.mrb[0].mxu0
    %v588 = vadd.f32 0.0, %v587
    %v589 = vpop.f32.mrb[0].mxu0
    %590 = vdwg.mxu0
    %v591 = vadd.f32 %v82, %v588
    %v592 = vmul.f32 %v591, 0.5
    %v593 = vsel %vm127, %v591, %v592
    %v594 = vtanh.pop %v593
    %v595 = vmul.f32 %v594, 0.5
    %v596 = vadd.f32 %v595, 0.5
    %v597 = vsel %vm127, %v594, %v596
    %v598 = vmul.f32 %v597, %v479
    %600 = vrot.lane.b32.xlu0 %v597, 64
    %v601 = vpop.permute.xlu0 %600
    %v603 = vmul.f32 %v597, %v601
    %605 = vrot.lane.b32.xlu0 %v603, 32
    %v606 = vpop.permute.xlu0 %605
    %v608 = vadd.f32 %v598, %v606
    %v609 = vtanh.pop %v608
    %611 = vrot.lane.b32.xlu0 %v609, 64
    %v612 = vpop.permute.xlu0 %611
    %v614 = vmul.f32 %v597, %v612
    %v615 = vsel %vm226, %v614, 0.0
    %v616 = vrot.slane %v615, 4
    %v617 = vadd.f32 %v615, %v616
    %v618 = vrot.slane %v617, 2
    %v619 = vadd.f32 %v617, %v618
    %v620 = vrot.slane %v619, 1
    %v621 = vadd.f32 %v619, %v620
    %v622 = vmul.f32 %v621, 0.5
    %vm623 = vcmp.ge.s32.totalorder %v253, 96
    %vm624 = vcmp.lt.s32.totalorder %v253, 128
    %vm625 = vmand %vm623, %vm624
    %626 = vst.msk [vmem:[%s2] sm:$0x1] %vm625, %v622
    %628 = vrot.lane.b32.xlu0 %v614, 32
    %v629 = vpop.permute.xlu0 %628
    %v630 = vsel %vm128, %v629, 0
    %632 = vmatprep.subr.mxu0 0.0
    %633 = vmatpush1.msra.mxu0 %v38
    %634 = vmatprep.subr.mxu0 0.0
    %635 = vmatpush1.msra.mxu0 %v39
    %636 = vmatprep.subr.mxu0 0.0
    %637 = vmatpush1.msra.mxu0 %v40
    %638 = vmatprep.subr.mxu0 0.0
    %639 = vmatpush1.msra.mxu0 %v41
    %640 = vmatprep.subr.mxu0 0.0
    %641 = vmatpush1.msra.mxu0 0.0
    %642 = vmatprep.subr.mxu0 0.0
    %643 = vmatpush1.msra.mxu0 0.0
    %644 = vmatprep.subr.mxu0 0.0
    %645 = vmatpush1.msra.mxu0 0.0
    %646 = vmatprep.subr.mxu0 0.0
    %647 = vmatpush1.msra.mxu0 0.0
    %648 = vmatprep.subr.mxu0 0.0
    %649 = vmatpush1.msra.mxu0 0.0
    %650 = vmatprep.subr.mxu0 0.0
    %651 = vmatpush1.msra.mxu0 0.0
    %652 = vmatprep.subr.mxu0 0.0
    %653 = vmatpush1.msra.mxu0 0.0
    %654 = vmatprep.subr.mxu0 0.0
    %655 = vmatpush1.msra.mxu0 0.0
    %656 = vmatprep.subr.mxu0 0.0
    %657 = vmatpush1.msra.mxu0 0.0
    %658 = vmatprep.subr.mxu0 0.0
    %659 = vmatpush1.msra.mxu0 0.0
    %660 = vmatprep.subr.mxu0 0.0
    %661 = vmatpush1.msra.mxu0 0.0
    %662 = vmatprep.subr.mxu0 0.0
    %663 = vmatpush1.msra.mxu0 0.0
    %664 = vmatprep.subr.mxu0 0.0
    %665 = vmatpush1.msra.mxu0 0.0
    %666 = vmatprep.subr.mxu0 0.0
    %667 = vmatpush1.msra.mxu0 0.0
    %668 = vmatprep.subr.mxu0 0.0
    %669 = vmatpush1.msra.mxu0 0.0
    %670 = vmatprep.subr.mxu0 0.0
    %671 = vmatpush1.msra.mxu0 0.0
    %672 = vmatprep.subr.mxu0 0.0
    %673 = vmatpush1.msra.mxu0 0.0
    %674 = vmatprep.subr.mxu0 0.0
    %675 = vmatpush1.msra.mxu0 0.0
    %676 = vmatprep.subr.mxu0 0.0
    %677 = vmatpush1.msra.mxu0 0.0
    %678 = vmatprep.subr.mxu0 0.0
    %679 = vmatpush1.msra.mxu0 0.0
    %680 = vmatprep.subr.mxu0 0.0
    %681 = vmatpush1.msra.mxu0 0.0
    %682 = vmatprep.subr.mxu0 0.0
    %683 = vmatpush1.msra.mxu0 0.0
    %684 = vmatprep.subr.mxu0 0.0
    %685 = vmatpush1.msra.mxu0 0.0
    %686 = vmatprep.subr.mxu0 0.0
    %687 = vmatpush1.msra.mxu0 0.0
    %688 = vmatprep.subr.mxu0 0.0
    %689 = vmatpush1.msra.mxu0 0.0
    %690 = vmatprep.subr.mxu0 0.0
    %691 = vmatpush1.msra.mxu0 0.0
    %692 = vmatprep.subr.mxu0 0.0
    %693 = vmatpush1.msra.mxu0 0.0
    %694 = vmatprep.subr.mxu0 0.0
    %695 = vmatpush1.msra.mxu0 0.0
    %696 = vmatprep.mubr.f32.mxu0 0.0
    %697 = vmatmul.mubr.f32.gmra.mrb[0].mxu0 %v630
    %v698 = vpop.f32.mrb[0].mxu0
    %v699 = vadd.f32 0.0, %v698
    %v700 = vpop.f32.mrb[0].mxu0
    %701 = vdwg.mxu0
    %v702 = vadd.f32 %v92, %v699
    %v703 = vmul.f32 %v702, 0.5
    %v704 = vsel %vm127, %v702, %v703
    %v705 = vtanh.pop %v704
    %v706 = vmul.f32 %v705, 0.5
    %v707 = vadd.f32 %v706, 0.5
    %v708 = vsel %vm127, %v705, %v707
    %v709 = vmul.f32 %v708, %v608
    %711 = vrot.lane.b32.xlu0 %v708, 64
    %v712 = vpop.permute.xlu0 %711
    %v714 = vmul.f32 %v708, %v712
    %716 = vrot.lane.b32.xlu0 %v714, 32
    %v717 = vpop.permute.xlu0 %716
    %v719 = vadd.f32 %v709, %v717
    %v720 = vtanh.pop %v719
    %722 = vrot.lane.b32.xlu0 %v720, 64
    %v723 = vpop.permute.xlu0 %722
    %v725 = vmul.f32 %v708, %v723
    %v726 = vsel %vm226, %v725, 0.0
    %v727 = vrot.slane %v726, 4
    %v728 = vadd.f32 %v726, %v727
    %v729 = vrot.slane %v728, 2
    %v730 = vadd.f32 %v728, %v729
    %v731 = vrot.slane %v730, 1
    %v732 = vadd.f32 %v730, %v731
    %v733 = vmul.f32 %v732, 0.5
    %v736 = vunpack.c.l.s4 1966171168
    %v737 = vunpack.c.0.s8 %v736
    %v738 = vlaneseq
    %v739 = vshrl.u32 %v738, 7
    %v740 = vsub.s32 %v737, %v739
    %v741 = vrot.slane %v733, %v740
    %v743 = vunpack.c.l.s4 1966171168
    %v744 = vunpack.c.0.s8 %v743
    %v745 = vlaneseq
    %v746 = vshrl.u32 %v745, 7
    %v747 = vsub.s32 %v744, %v746
    %v748 = vrot.slane %v741, %v747
    %749 = vrot.lane.b32.xlu0 %v748, 32
    %v750 = vpop.permute.xlu0 %749
    %752 = vst.msk [vmem:[%s2 + $0x1] sm:$0x1] %vm256, %v750
    %754 = vrot.lane.b32.xlu0 %v725, 32
    %v755 = vpop.permute.xlu0 %754
    %v756 = vsel %vm128, %v755, 0
    %758 = vmatprep.subr.mxu0 0.0
    %759 = vmatpush1.msra.mxu0 %v38
    %760 = vmatprep.subr.mxu0 0.0
    %761 = vmatpush1.msra.mxu0 %v39
    %762 = vmatprep.subr.mxu0 0.0
    %763 = vmatpush1.msra.mxu0 %v40
    %764 = vmatprep.subr.mxu0 0.0
    %765 = vmatpush1.msra.mxu0 %v41
    %766 = vmatprep.subr.mxu0 0.0
    %767 = vmatpush1.msra.mxu0 0.0
    %768 = vmatprep.subr.mxu0 0.0
    %769 = vmatpush1.msra.mxu0 0.0
    %770 = vmatprep.subr.mxu0 0.0
    %771 = vmatpush1.msra.mxu0 0.0
    %772 = vmatprep.subr.mxu0 0.0
    %773 = vmatpush1.msra.mxu0 0.0
    %774 = vmatprep.subr.mxu0 0.0
    %775 = vmatpush1.msra.mxu0 0.0
    %776 = vmatprep.subr.mxu0 0.0
    %777 = vmatpush1.msra.mxu0 0.0
    %778 = vmatprep.subr.mxu0 0.0
    %779 = vmatpush1.msra.mxu0 0.0
    %780 = vmatprep.subr.mxu0 0.0
    %781 = vmatpush1.msra.mxu0 0.0
    %782 = vmatprep.subr.mxu0 0.0
    %783 = vmatpush1.msra.mxu0 0.0
    %784 = vmatprep.subr.mxu0 0.0
    %785 = vmatpush1.msra.mxu0 0.0
    %786 = vmatprep.subr.mxu0 0.0
    %787 = vmatpush1.msra.mxu0 0.0
    %788 = vmatprep.subr.mxu0 0.0
    %789 = vmatpush1.msra.mxu0 0.0
    %790 = vmatprep.subr.mxu0 0.0
    %791 = vmatpush1.msra.mxu0 0.0
    %792 = vmatprep.subr.mxu0 0.0
    %793 = vmatpush1.msra.mxu0 0.0
    %794 = vmatprep.subr.mxu0 0.0
    %795 = vmatpush1.msra.mxu0 0.0
    %796 = vmatprep.subr.mxu0 0.0
    %797 = vmatpush1.msra.mxu0 0.0
    %798 = vmatprep.subr.mxu0 0.0
    %799 = vmatpush1.msra.mxu0 0.0
    %800 = vmatprep.subr.mxu0 0.0
    %801 = vmatpush1.msra.mxu0 0.0
    %802 = vmatprep.subr.mxu0 0.0
    %803 = vmatpush1.msra.mxu0 0.0
    %804 = vmatprep.subr.mxu0 0.0
    %805 = vmatpush1.msra.mxu0 0.0
    %806 = vmatprep.subr.mxu0 0.0
    %807 = vmatpush1.msra.mxu0 0.0
    %808 = vmatprep.subr.mxu0 0.0
    %809 = vmatpush1.msra.mxu0 0.0
    %810 = vmatprep.subr.mxu0 0.0
    %811 = vmatpush1.msra.mxu0 0.0
    %812 = vmatprep.subr.mxu0 0.0
    %813 = vmatpush1.msra.mxu0 0.0
    %814 = vmatprep.subr.mxu0 0.0
    %815 = vmatpush1.msra.mxu0 0.0
    %816 = vmatprep.subr.mxu0 0.0
    %817 = vmatpush1.msra.mxu0 0.0
    %818 = vmatprep.subr.mxu0 0.0
    %819 = vmatpush1.msra.mxu0 0.0
    %820 = vmatprep.subr.mxu0 0.0
    %821 = vmatpush1.msra.mxu0 0.0
    %822 = vmatprep.mubr.f32.mxu0 0.0
    %823 = vmatmul.mubr.f32.gmra.mrb[0].mxu0 %v756
    %v824 = vpop.f32.mrb[0].mxu0
    %v825 = vadd.f32 0.0, %v824
    %v826 = vpop.f32.mrb[0].mxu0
    %827 = vdwg.mxu0
    %v828 = vadd.f32 %v102, %v825
    %v829 = vmul.f32 %v828, 0.5
    %v830 = vsel %vm127, %v828, %v829
    %v831 = vtanh.pop %v830
    %v832 = vmul.f32 %v831, 0.5
    %v833 = vadd.f32 %v832, 0.5
    %v834 = vsel %vm127, %v831, %v833
    %v835 = vmul.f32 %v834, %v719
    %837 = vrot.lane.b32.xlu0 %v834, 64
    %v838 = vpop.permute.xlu0 %837
    %v840 = vmul.f32 %v834, %v838
    %842 = vrot.lane.b32.xlu0 %v840, 32
    %v843 = vpop.permute.xlu0 %842
    %v845 = vadd.f32 %v835, %v843
    %v846 = vtanh.pop %v845
    %848 = vrot.lane.b32.xlu0 %v846, 64
    %v849 = vpop.permute.xlu0 %848
    %v851 = vmul.f32 %v834, %v849
    %v852 = vsel %vm226, %v851, 0.0
    %v853 = vrot.slane %v852, 4
    %v854 = vadd.f32 %v852, %v853
    %v855 = vrot.slane %v854, 2
    %v856 = vadd.f32 %v854, %v855
    %v857 = vrot.slane %v856, 1
    %v858 = vadd.f32 %v856, %v857
    %v859 = vmul.f32 %v858, 0.5
    %v862 = vunpack.c.l.s4 1966171168
    %v863 = vunpack.c.0.s8 %v862
    %v864 = vlaneseq
    %v865 = vshrl.u32 %v864, 7
    %v866 = vsub.s32 %v863, %v865
    %v867 = vrot.slane %v859, %v866
    %v869 = vunpack.c.l.s4 1966171168
    %v870 = vunpack.c.0.s8 %v869
    %v871 = vlaneseq
    %v872 = vshrl.u32 %v871, 7
    %v873 = vsub.s32 %v870, %v872
    %v874 = vrot.slane %v867, %v873
    %875 = vrot.lane.b32.xlu0 %v874, 64
    %v876 = vpop.permute.xlu0 %875
    %878 = vst.msk [vmem:[%s2 + $0x1] sm:$0x1] %vm385, %v876
    %880 = vrot.lane.b32.xlu0 %v851, 32
    %v881 = vpop.permute.xlu0 %880
    %v882 = vsel %vm128, %v881, 0
    %884 = vmatprep.subr.mxu0 0.0
    %885 = vmatpush1.msra.mxu0 %v38
    %886 = vmatprep.subr.mxu0 0.0
    %887 = vmatpush1.msra.mxu0 %v39
    %888 = vmatprep.subr.mxu0 0.0
    %889 = vmatpush1.msra.mxu0 %v40
    %890 = vmatprep.subr.mxu0 0.0
    %891 = vmatpush1.msra.mxu0 %v41
    %892 = vmatprep.subr.mxu0 0.0
    %893 = vmatpush1.msra.mxu0 0.0
    %894 = vmatprep.subr.mxu0 0.0
    %895 = vmatpush1.msra.mxu0 0.0
    %896 = vmatprep.subr.mxu0 0.0
    %897 = vmatpush1.msra.mxu0 0.0
    %898 = vmatprep.subr.mxu0 0.0
    %899 = vmatpush1.msra.mxu0 0.0
    %900 = vmatprep.subr.mxu0 0.0
    %901 = vmatpush1.msra.mxu0 0.0
    %902 = vmatprep.subr.mxu0 0.0
    %903 = vmatpush1.msra.mxu0 0.0
    %904 = vmatprep.subr.mxu0 0.0
    %905 = vmatpush1.msra.mxu0 0.0
    %906 = vmatprep.subr.mxu0 0.0
    %907 = vmatpush1.msra.mxu0 0.0
    %908 = vmatprep.subr.mxu0 0.0
    %909 = vmatpush1.msra.mxu0 0.0
    %910 = vmatprep.subr.mxu0 0.0
    %911 = vmatpush1.msra.mxu0 0.0
    %912 = vmatprep.subr.mxu0 0.0
    %913 = vmatpush1.msra.mxu0 0.0
    %914 = vmatprep.subr.mxu0 0.0
    %915 = vmatpush1.msra.mxu0 0.0
    %916 = vmatprep.subr.mxu0 0.0
    %917 = vmatpush1.msra.mxu0 0.0
    %918 = vmatprep.subr.mxu0 0.0
    %919 = vmatpush1.msra.mxu0 0.0
    %920 = vmatprep.subr.mxu0 0.0
    %921 = vmatpush1.msra.mxu0 0.0
    %922 = vmatprep.subr.mxu0 0.0
    %923 = vmatpush1.msra.mxu0 0.0
    %924 = vmatprep.subr.mxu0 0.0
    %925 = vmatpush1.msra.mxu0 0.0
    %926 = vmatprep.subr.mxu0 0.0
    %927 = vmatpush1.msra.mxu0 0.0
    %928 = vmatprep.subr.mxu0 0.0
    %929 = vmatpush1.msra.mxu0 0.0
    %930 = vmatprep.subr.mxu0 0.0
    %931 = vmatpush1.msra.mxu0 0.0
    %932 = vmatprep.subr.mxu0 0.0
    %933 = vmatpush1.msra.mxu0 0.0
    %934 = vmatprep.subr.mxu0 0.0
    %935 = vmatpush1.msra.mxu0 0.0
    %936 = vmatprep.subr.mxu0 0.0
    %937 = vmatpush1.msra.mxu0 0.0
    %938 = vmatprep.subr.mxu0 0.0
    %939 = vmatpush1.msra.mxu0 0.0
    %940 = vmatprep.subr.mxu0 0.0
    %941 = vmatpush1.msra.mxu0 0.0
    %942 = vmatprep.subr.mxu0 0.0
    %943 = vmatpush1.msra.mxu0 0.0
    %944 = vmatprep.subr.mxu0 0.0
    %945 = vmatpush1.msra.mxu0 0.0
    %946 = vmatprep.subr.mxu0 0.0
    %947 = vmatpush1.msra.mxu0 0.0
    %948 = vmatprep.mubr.f32.mxu0 0.0
    %949 = vmatmul.mubr.f32.gmra.mrb[0].mxu0 %v882
    %v950 = vpop.f32.mrb[0].mxu0
    %v951 = vadd.f32 0.0, %v950
    %v952 = vpop.f32.mrb[0].mxu0
    %953 = vdwg.mxu0
    %v954 = vadd.f32 %v112, %v951
    %v955 = vmul.f32 %v954, 0.5
    %v956 = vsel %vm127, %v954, %v955
    %v957 = vtanh.pop %v956
    %v958 = vmul.f32 %v957, 0.5
    %v959 = vadd.f32 %v958, 0.5
    %v960 = vsel %vm127, %v957, %v959
    %v961 = vmul.f32 %v960, %v845
    %963 = vrot.lane.b32.xlu0 %v960, 64
    %v964 = vpop.permute.xlu0 %963
    %v966 = vmul.f32 %v960, %v964
    %968 = vrot.lane.b32.xlu0 %v966, 32
    %v969 = vpop.permute.xlu0 %968
    %v971 = vadd.f32 %v961, %v969
    %v972 = vtanh.pop %v971
    %974 = vrot.lane.b32.xlu0 %v972, 64
    %v975 = vpop.permute.xlu0 %974
    %v977 = vmul.f32 %v960, %v975
    %v978 = vsel %vm226, %v977, 0.0
    %v979 = vrot.slane %v978, 4
    %v980 = vadd.f32 %v978, %v979
    %v981 = vrot.slane %v980, 2
    %v982 = vadd.f32 %v980, %v981
    %v983 = vrot.slane %v982, 1
    %v984 = vadd.f32 %v982, %v983
    %v985 = vmul.f32 %v984, 0.5
    %v988 = vunpack.c.l.s4 1966171168
    %v989 = vunpack.c.0.s8 %v988
    %v990 = vlaneseq
    %v991 = vshrl.u32 %v990, 7
    %v992 = vsub.s32 %v989, %v991
    %v993 = vrot.slane %v985, %v992
    %v995 = vunpack.c.l.s4 1966171168
    %v996 = vunpack.c.0.s8 %v995
    %v997 = vlaneseq
    %v998 = vshrl.u32 %v997, 7
    %v999 = vsub.s32 %v996, %v998
    %v1000 = vrot.slane %v993, %v999
    %1001 = vrot.lane.b32.xlu0 %v1000, 96
    %v1002 = vpop.permute.xlu0 %1001
    %1004 = vst.msk [vmem:[%s2 + $0x1] sm:$0x1] %vm514, %v1002
    %1006 = vrot.lane.b32.xlu0 %v977, 32
    %v1007 = vpop.permute.xlu0 %1006
    %v1008 = vsel %vm128, %v1007, 0
    %1010 = vmatprep.subr.mxu0 0.0
    %1011 = vmatpush1.msra.mxu0 %v38
    %1012 = vmatprep.subr.mxu0 0.0
    %1013 = vmatpush1.msra.mxu0 %v39
    %1014 = vmatprep.subr.mxu0 0.0
    %1015 = vmatpush1.msra.mxu0 %v40
    %1016 = vmatprep.subr.mxu0 0.0
    %1017 = vmatpush1.msra.mxu0 %v41
    %1018 = vmatprep.subr.mxu0 0.0
    %1019 = vmatpush1.msra.mxu0 0.0
    %1020 = vmatprep.subr.mxu0 0.0
    %1021 = vmatpush1.msra.mxu0 0.0
    %1022 = vmatprep.subr.mxu0 0.0
    %1023 = vmatpush1.msra.mxu0 0.0
    %1024 = vmatprep.subr.mxu0 0.0
    %1025 = vmatpush1.msra.mxu0 0.0
    %1026 = vmatprep.subr.mxu0 0.0
    %1027 = vmatpush1.msra.mxu0 0.0
    %1028 = vmatprep.subr.mxu0 0.0
    %1029 = vmatpush1.msra.mxu0 0.0
    %1030 = vmatprep.subr.mxu0 0.0
    %1031 = vmatpush1.msra.mxu0 0.0
    %1032 = vmatprep.subr.mxu0 0.0
    %1033 = vmatpush1.msra.mxu0 0.0
    %1034 = vmatprep.subr.mxu0 0.0
    %1035 = vmatpush1.msra.mxu0 0.0
    %1036 = vmatprep.subr.mxu0 0.0
    %1037 = vmatpush1.msra.mxu0 0.0
    %1038 = vmatprep.subr.mxu0 0.0
    %1039 = vmatpush1.msra.mxu0 0.0
    %1040 = vmatprep.subr.mxu0 0.0
    %1041 = vmatpush1.msra.mxu0 0.0
    %1042 = vmatprep.subr.mxu0 0.0
    %1043 = vmatpush1.msra.mxu0 0.0
    %1044 = vmatprep.subr.mxu0 0.0
    %1045 = vmatpush1.msra.mxu0 0.0
    %1046 = vmatprep.subr.mxu0 0.0
    %1047 = vmatpush1.msra.mxu0 0.0
    %1048 = vmatprep.subr.mxu0 0.0
    %1049 = vmatpush1.msra.mxu0 0.0
    %1050 = vmatprep.subr.mxu0 0.0
    %1051 = vmatpush1.msra.mxu0 0.0
    %1052 = vmatprep.subr.mxu0 0.0
    %1053 = vmatpush1.msra.mxu0 0.0
    %1054 = vmatprep.subr.mxu0 0.0
    %1055 = vmatpush1.msra.mxu0 0.0
    %1056 = vmatprep.subr.mxu0 0.0
    %1057 = vmatpush1.msra.mxu0 0.0
    %1058 = vmatprep.subr.mxu0 0.0
    %1059 = vmatpush1.msra.mxu0 0.0
    %1060 = vmatprep.subr.mxu0 0.0
    %1061 = vmatpush1.msra.mxu0 0.0
    %1062 = vmatprep.subr.mxu0 0.0
    %1063 = vmatpush1.msra.mxu0 0.0
    %1064 = vmatprep.subr.mxu0 0.0
    %1065 = vmatpush1.msra.mxu0 0.0
    %1066 = vmatprep.subr.mxu0 0.0
    %1067 = vmatpush1.msra.mxu0 0.0
    %1068 = vmatprep.subr.mxu0 0.0
    %1069 = vmatpush1.msra.mxu0 0.0
    %1070 = vmatprep.subr.mxu0 0.0
    %1071 = vmatpush1.msra.mxu0 0.0
    %1072 = vmatprep.subr.mxu0 0.0
    %1073 = vmatpush1.msra.mxu0 0.0
    %1074 = vmatprep.mubr.f32.mxu0 0.0
    %1075 = vmatmul.mubr.f32.gmra.mrb[0].mxu0 %v1008
    %v1076 = vpop.f32.mrb[0].mxu0
    %v1077 = vadd.f32 0.0, %v1076
    %v1078 = vpop.f32.mrb[0].mxu0
    %1079 = vdwg.mxu0
    %v1080 = vadd.f32 %v122, %v1077
    %v1081 = vmul.f32 %v1080, 0.5
    %v1082 = vsel %vm127, %v1080, %v1081
    %v1083 = vtanh.pop %v1082
    %v1084 = vmul.f32 %v1083, 0.5
    %v1085 = vadd.f32 %v1084, 0.5
    %v1086 = vsel %vm127, %v1083, %v1085
    %v1087 = vmul.f32 %v1086, %v971
    %1089 = vrot.lane.b32.xlu0 %v1086, 64
    %v1090 = vpop.permute.xlu0 %1089
    %v1092 = vmul.f32 %v1086, %v1090
    %1094 = vrot.lane.b32.xlu0 %v1092, 32
    %v1095 = vpop.permute.xlu0 %1094
    %v1097 = vadd.f32 %v1087, %v1095
    %v1098 = vtanh.pop %v1097
    %1100 = vrot.lane.b32.xlu0 %v1098, 64
    %v1101 = vpop.permute.xlu0 %1100
    %v1103 = vmul.f32 %v1086, %v1101
    %v1104 = vsel %vm226, %v1103, 0.0
    %v1105 = vrot.slane %v1104, 4
    %v1106 = vadd.f32 %v1104, %v1105
    %v1107 = vrot.slane %v1106, 2
    %v1108 = vadd.f32 %v1106, %v1107
    %v1109 = vrot.slane %v1108, 1
    %v1110 = vadd.f32 %v1108, %v1109
    %v1111 = vmul.f32 %v1110, 0.5
    %1112 = vst.msk [vmem:[%s2 + $0x1] sm:$0x1] %vm625, %v1111
    // Predicated region
    $region18: #{lstm_encoder_fwd.1} parent=1 // pred_check
      _
    $region19: #{lstm_encoder_fwd.1} parent=1 // pred_check_branch
      %1114 = sbr.rel (0) target = $region21
    $region20: #{lstm_encoder_fwd.1} parent=1 // pred_region
      _
    $region21: #{lstm_encoder_fwd.1} parent=1 // pred_fallthru
      _
    // Predicated region
    $region22: #{lstm_encoder_fwd.1} parent=1 // pred_check
      _
    $region23: #{lstm_encoder_fwd.1} parent=1 // pred_check_branch
      %1116 = sbr.rel (0) target = $region25
    $region24: #{lstm_encoder_fwd.1} parent=1 // pred_region
      _
    $region25: #{lstm_encoder_fwd.1} parent=1 // pred_fallthru
      _
    %1117 = vsyncpa [#allocation3], 1
    %1118 = vsyncpa [#allocation4], 1

</llo_original>
